<compile_context>
chip_gen: v7x
topology: tpu7x:2x2x1
jax: 0.10.0
libtpu: 0.0.40
codegen_flags: <defaults>
</compile_context>

<pallas_src>
import jax
import jax.numpy as jnp
from jax.experimental import pallas as pl
from jax.experimental.pallas import tpu as pltpu

KH = KW = 3      # conv kernel size of the synthetic backbone
LANE = 128       # TPU lane width


def _round_up(x, m):
    return ((x + m - 1) // m) * m


def _pick_group(bp, cap=64):
    """Largest group size (multiple of 8, <= cap) dividing bp; prefer even grid."""
    cands = [g for g in range(8, min(bp, cap) + 1, 8) if bp % g == 0]
    even = [g for g in cands if (bp // g) % 2 == 0]
    pool = even if even else cands
    return max(pool) if pool else bp


def attri_cnn_kernel(xcol_ref, wcol_ref, w12_ref, attr_y_ref, feat_ref):
    # xcol_ref  : (BG*H*W, K)   im2col patches for BG images, bf16, K = 9*Cin (unpadded)
    # wcol_ref  : (K, Fp)       conv weight as one (9*Cin, Cfeat) matrix, bf16, N-padded
    # w12_ref   : (Fp, NCp)     fused head weight fc1^T @ fc2^T, bf16, padded
    # attr_y_ref: (BG, NCp)     output logits block (f32)
    # feat_ref  : (BG, Fp)      pooled backbone feature block (f32)
    bg = feat_ref.shape[0]
    hw = xcol_ref.shape[0] // bg
    fp = wcol_ref.shape[1]

    # Synthetic backbone: conv (single bf16 MXU matmul, K = 9*Cin) -> ReLU.
    conv = jnp.dot(xcol_ref[...], wcol_ref[...],
                   preferred_element_type=jnp.float32)           # (BG*HW, Fp) f32
    conv = jnp.maximum(conv, 0.0)                                 # ReLU (VPU)

    # Global average pool as a sublane reduce (VPU/XLU) -- not an MXU matmul.
    feat = jnp.sum(conv.reshape(bg, hw, fp), axis=1) * (1.0 / hw)  # (BG, Fp) f32
    feat_ref[...] = feat

    # Fused AttriCNN head: attr_y = feat @ (fc1^T @ fc2^T), bf16 operands, f32 acc.
    attr_y_ref[...] = jnp.dot(feat.astype(jnp.bfloat16), w12_ref[...],
                              preferred_element_type=jnp.float32)  # (BG, NCp)


def attri_cnn_forward(x_nchw, w_conv, w1, w2):
    """Returns (attr_y, (feat, fc1_weight)) matching the PyTorch forward."""
    B, Cin, H, W = x_nchw.shape
    Cfeat = w_conv.shape[3]
    A = w1.shape[0]
    NC = w2.shape[0]
    HW = H * W
    K = KH * KW * Cin

    # Lane-dense padded dims (outputs / weight N-sides only; K stays unpadded).
    Fp = _round_up(Cfeat, LANE)
    NCp = _round_up(NC, LANE)

    # Batch padded to a multiple of 8; group so the grid stays even when possible.
    Bp = _round_up(B, 8)
    BG = _pick_group(Bp)
    grid = (Bp // BG,)

    # ---- wrapper-side layout work (XLA): im2col, weight fuse/transpose, bf16 cast ----
    x_nhwc = jnp.transpose(x_nchw, (0, 2, 3, 1)).astype(jnp.float32)      # NCHW -> NHWC
    if Bp != B:
        x_nhwc = jnp.pad(x_nhwc, ((0, Bp - B), (0, 0), (0, 0), (0, 0)))
    xp = jnp.pad(x_nhwc, ((0, 0), (1, 1), (1, 1), (0, 0)))                # pad=1 for 3x3 conv
    patches = [xp[:, ky:ky + H, kx:kx + W, :]
               for ky in range(KH) for kx in range(KW)]
    xcol = jnp.concatenate(patches, axis=-1).reshape(Bp * HW, K)          # (Bp*HW, 9*Cin)
    xcol = xcol.astype(jnp.bfloat16)                                      # bf16, K unpadded

    w_col = w_conv.reshape(K, Cfeat).astype(jnp.float32)                  # matches im2col order
    w_col = jnp.pad(w_col, ((0, 0), (0, Fp - Cfeat))).astype(jnp.bfloat16)

    # Fused head weight (exact up to f32 reassociation: both linears are bias-free).
    w12 = w1.T.astype(jnp.float32) @ w2.T.astype(jnp.float32)             # (Cfeat, NC)
    w12 = jnp.pad(w12, ((0, Fp - Cfeat), (0, NCp - NC))).astype(jnp.bfloat16)

    flops = 2 * Bp * HW * K * Cfeat + Bp * HW * Cfeat + 2 * Bp * Cfeat * NC
    bytes_accessed = (xcol.size * 2 + w_col.size * 2 + w12.size * 2
                      + Bp * NCp * 4 + Bp * Fp * 4)

    attr_y_p, feat_p = pl.pallas_call(
        attri_cnn_kernel,
        out_shape=(
            jax.ShapeDtypeStruct((Bp, NCp), jnp.float32),
            jax.ShapeDtypeStruct((Bp, Fp), jnp.float32),
        ),
        grid_spec=pltpu.PrefetchScalarGridSpec(
            num_scalar_prefetch=0,
            grid=grid,                                          # one step per image group
            in_specs=[
                pl.BlockSpec((BG * HW, K), lambda g: (g, 0)),   # im2col rows for this group
                pl.BlockSpec((K, Fp), lambda g: (0, 0)),        # conv weight (resident)
                pl.BlockSpec((Fp, NCp), lambda g: (0, 0)),      # fused head weight (resident)
            ],
            out_specs=[
                pl.BlockSpec((BG, NCp), lambda g: (g, 0)),      # lane-dense (8,128) stores
                pl.BlockSpec((BG, Fp), lambda g: (g, 0)),
            ],
        ),
        compiler_params=pltpu.CompilerParams(
            dimension_semantics=("parallel",)),
        cost_estimate=pl.CostEstimate(
            flops=flops, transcendentals=0, bytes_accessed=bytes_accessed),
    )(xcol, w_col, w12)

    attr_y = attr_y_p[:B, :NC]
    feat = feat_p[:B, :Cfeat]
    return attr_y, (feat, w1)


def reference_forward(x_nchw, w_conv, w1, w2):
    """Pure-jnp f32 reference of the same computation (module semantics)."""
    x = jnp.transpose(x_nchw, (0, 2, 3, 1)).astype(jnp.float32)
    B, H, W, Cin = x.shape
    Cfeat = w_conv.shape[3]
    xp = jnp.pad(x, ((0, 0), (1, 1), (1, 1), (0, 0)))
    out = jnp.zeros((B, H, W, Cfeat), jnp.float32)
    for ky in range(KH):
        for kx in range(KW):
            out = out + jnp.einsum(
                "bhwc,cf->bhwf", xp[:, ky:ky + H, kx:kx + W, :], w_conv[ky, kx]
            )
    out = jnp.maximum(out, 0.0)
    feat = out.mean(axis=(1, 2))
    xt = feat @ w1.T
    attr_y = xt @ w2.T
    return attr_y, feat


if __name__ == "__main__":
    # Small shapes consistent with the module (scaled down from ResNet sizes).
    # B=16 -> grid=(2,) with BG=8 (even grid so v7x can shard across 2 TCs).
    B, Cin, H, W = 16, 4, 16, 16  # input image batch (NCHW)
    Cfeat = 32                    # feat_size (cnn.fc.in_features)
    num_attr = 16                 # attribute dimension (312 in the paper)
    num_classes = 24              # classes (200 in the paper)

    key = jax.random.PRNGKey(0)
    kx, kc, k1, k2 = jax.random.split(key, 4)
    x = jax.random.normal(kx, (B, Cin, H, W), dtype=jnp.float32)
    w_conv = jax.random.normal(kc, (KH, KW, Cin, Cfeat), dtype=jnp.float32) * 0.1
    w_fc1 = jax.random.normal(k1, (num_attr, Cfeat), dtype=jnp.float32) * 0.1
    w_attr = jax.random.normal(k2, (num_classes, num_attr), dtype=jnp.float32) * 0.1  # fc2 (frozen)

    attr_y, (feat, fc1_w) = attri_cnn_forward(x, w_conv, w_fc1, w_attr)
    jax.block_until_ready(attr_y)
    jax.block_until_ready(feat)

    ref_attr_y, ref_feat = reference_forward(x, w_conv, w_fc1, w_attr)

    assert attr_y.shape == (B, num_classes)
    assert feat.shape == (B, Cfeat)
    assert fc1_w.shape == (num_attr, Cfeat)
    # bf16 MXU operands with f32 accumulation: verify against the f32 reference
    # with tolerances loose enough for bf16 operand rounding (~0.2% relative).
    assert jnp.allclose(feat, ref_feat, atol=2e-2, rtol=2e-2)
    assert jnp.allclose(attr_y, ref_attr_y, atol=3e-2, rtol=3e-2)

    print("KERNEL_OK")
</pallas_src>

<mosaic_0001>
module attributes {stable_mosaic.version = 11 : i64} {
  func.func @attri_cnn_kernel(%arg0: i32, %arg1: memref<2048x36xbf16, #tpu.memory_space<vmem>>, %arg2: memref<36x128xbf16, #tpu.memory_space<vmem>>, %arg3: memref<128x128xbf16, #tpu.memory_space<vmem>>, %arg4: memref<8x128xf32, #tpu.memory_space<vmem>>, %arg5: memref<8x128xf32, #tpu.memory_space<vmem>>) attributes {dimension_semantics = [#tpu.dimension_semantics<parallel>], iteration_bounds = array<i64: 2>, scalar_prefetch = 0 : i64, scratch_operands = 0 : i64, tpu.core_type = #tpu.core_type<tc>, window_params = [{transform_indices = @transform_0, window_bounds = array<i64: 2048, 36>}, {pipeline_mode = #tpu.pipeline_mode<synchronous>, transform_indices = @transform_1, window_bounds = array<i64: 36, 128>}, {pipeline_mode = #tpu.pipeline_mode<synchronous>, transform_indices = @transform_2, window_bounds = array<i64: 128, 128>}, {transform_indices = @transform_3, window_bounds = array<i64: 8, 128>}, {transform_indices = @transform_4, window_bounds = array<i64: 8, 128>}]} {
    %c0 = arith.constant 0 : index
    %c0_0 = arith.constant 0 : index
    %0 = vector.load %arg1[%c0, %c0_0] : memref<2048x36xbf16, #tpu.memory_space<vmem>>, vector<2048x36xbf16>
    %c0_1 = arith.constant 0 : index
    %c0_2 = arith.constant 0 : index
    %1 = vector.load %arg2[%c0_1, %c0_2] : memref<36x128xbf16, #tpu.memory_space<vmem>>, vector<36x128xbf16>
    %cst = arith.constant dense<0.000000e+00> : vector<2048x128xf32>
    %2 = tpu.matmul %0, %1, %cst {dimension_numbers = #tpu.dot_dimension_numbers<[1], [0], [0], [1], [0, 0, 1, 1], [], []>} : vector<2048x36xbf16>, vector<36x128xbf16>, vector<2048x128xf32> -> vector<2048x128xf32>
    %cst_3 = arith.constant 0.000000e+00 : f32
    %3 = vector.broadcast %cst_3 : f32 to vector<2048x128xf32>
    %4 = arith.maximumf %2, %3 : vector<2048x128xf32>
    %5 = vector.shape_cast %4 : vector<2048x128xf32> to vector<8x256x128xf32>
    %cst_4 = arith.constant dense<0.000000e+00> : vector<8x128xf32>
    %6 = vector.multi_reduction <add>, %5, %cst_4 [1] : vector<8x256x128xf32> to vector<8x128xf32>
    %cst_5 = arith.constant 3.906250e-03 : f32
    %7 = vector.broadcast %cst_5 : f32 to vector<8x128xf32>
    %8 = arith.mulf %6, %7 : vector<8x128xf32>
    %c0_6 = arith.constant 0 : index
    %c0_7 = arith.constant 0 : index
    %9 = vector.load %arg5[%c0_6, %c0_7] : memref<8x128xf32, #tpu.memory_space<vmem>>, vector<8x128xf32>
    tpu.vector_store %arg5[%c0_6, %c0_7], %8 {strides = array<i32>} : memref<8x128xf32, #tpu.memory_space<vmem>>, vector<8x128xf32>,
    %10 = arith.truncf %8 : vector<8x128xf32> to vector<8x128xbf16>
    %c0_8 = arith.constant 0 : index
    %c0_9 = arith.constant 0 : index
    %11 = vector.load %arg3[%c0_8, %c0_9] : memref<128x128xbf16, #tpu.memory_space<vmem>>, vector<128x128xbf16>
    %cst_10 = arith.constant dense<0.000000e+00> : vector<8x128xf32>
    %12 = tpu.matmul %10, %11, %cst_10 {dimension_numbers = #tpu.dot_dimension_numbers<[1], [0], [0], [1], [0, 0, 1, 1], [], []>} : vector<8x128xbf16>, vector<128x128xbf16>, vector<8x128xf32> -> vector<8x128xf32>
    %c0_11 = arith.constant 0 : index
    %c0_12 = arith.constant 0 : index
    %13 = vector.load %arg4[%c0_11, %c0_12] : memref<8x128xf32, #tpu.memory_space<vmem>>, vector<8x128xf32>
    tpu.vector_store %arg4[%c0_11, %c0_12], %12 {strides = array<i32>} : memref<8x128xf32, #tpu.memory_space<vmem>>, vector<8x128xf32>,
    return
  }
  func.func @transform_0(%arg0: i32) -> (i32, i32) {
    %c0_i32 = arith.constant 0 : i32
    %c0_i32_0 = arith.constant 0 : i32
    return %arg0, %c0_i32 : i32, i32
  }
  func.func @transform_1(%arg0: i32) -> (i32, i32) {
    %c0_i32 = arith.constant 0 : i32
    %c0_i32_0 = arith.constant 0 : i32
    %c0_i32_1 = arith.constant 0 : i32
    return %c0_i32, %c0_i32_0 : i32, i32
  }
  func.func @transform_2(%arg0: i32) -> (i32, i32) {
    %c0_i32 = arith.constant 0 : i32
    %c0_i32_0 = arith.constant 0 : i32
    %c0_i32_1 = arith.constant 0 : i32
    return %c0_i32, %c0_i32_0 : i32, i32
  }
  func.func @transform_3(%arg0: i32) -> (i32, i32) {
    %c0_i32 = arith.constant 0 : i32
    %c0_i32_0 = arith.constant 0 : i32
    return %arg0, %c0_i32 : i32, i32
  }
  func.func @transform_4(%arg0: i32) -> (i32, i32) {
    %c0_i32 = arith.constant 0 : i32
    %c0_i32_0 = arith.constant 0 : i32
    return %arg0, %c0_i32 : i32, i32
  }
}

</mosaic_0001>

<llo_original>
// kernel: tpu_custom_call.1
$region0: #{tpu_custom_call.1}
  #allocation0 [shape = 'u32[]', space=smem, size = 0x4, offset = 0x4, fixed_abs, tag = 'smem constant byte address 0x4 - core index']
  #allocation1 [shape = 'u32[144,128]{1,0:T(1,128)}', space=vmem, size = 0x12000, scoped, tag = 'internal scratch']
  %s0 = inlined_call_operand.vmem [shape: bf16[4096,36], index: 0, kind: input, shape index: {}]
  %s1 = inlined_call_operand.vmem [shape: bf16[36,128], index: 1, kind: input, shape index: {}]
  %s2 = inlined_call_operand.vmem [shape: bf16[128,128], index: 2, kind: input, shape index: {}]
  %s3 = inlined_call_operand.hbm [shape: f32[16,128], index: 3, kind: output, shape index: {0}]
  %s4 = inlined_call_operand.hbm [shape: f32[16,128], index: 4, kind: output, shape index: {1}]
  %5 = xla_tuple %s3, %s4
  %s6 = sld [smem:[#allocation0]]
  $region53: #{tpu_custom_call.1} parent=0
    _
  %s8 = ssub.s32 1, %s6
  %s9 = scalar_select 0, %s8, %s6
  $region1: #{tpu_custom_call.1} parent=0
    #allocation2 [shape = 'u8[8192]{0}', space=vmem, size = 0x2000, scoped, tag = 'output window, operand 0']
    #allocation3 [shape = 's32[2]{0}', space=sflag, size = 0x8, scoped, tag = 'scoped memory for tpu_custom_call.1']
    #allocation4 [shape = 'u8[8192]{0}', space=vmem, size = 0x2000, scoped, tag = 'output window, operand 1']
    #allocation5 [shape = 's32[2]{0}', space=sflag, size = 0x8, scoped, tag = 'scoped memory for tpu_custom_call.1']
    %10 = vsyncpa [#allocation3], 0
    %s11 = scalar_lea.sflag [#allocation3], 1
    %12 = vsyncpa %s11, 0
    %13 = vsyncpa [#allocation5], 0
    %s14 = scalar_lea.sflag [#allocation5], 1
    %15 = vsyncpa %s14, 0
    loop: start=0, step=1, limit=4
    $region2: #{tpu_custom_call.1} parent=1 // loop_pre_header
      _
    $region3: #{tpu_custom_call.1} parent=1 // loop_header
      %s17 = sphi 0, %s21
      %p18 = scmp.ge.s32.totalorder %s17, 4
      %s27 = sphi 0, %s29
      %s30 = sphi 0, %s27
      %s31 = sphi 0, %s30
      %s47 = sphi 0, %s31
      %s51 = sphi 0, %s51
      %s53 = sphi 0, %s51
      %s54 = sphi 0, %s53
      %s68 = sphi 0, %s54
      %s72 = sphi 0, %s72
      %s74 = sphi 0, %s72
      %s75 = sphi 0, %s74
      %s89 = sphi 0, %s75
      %s95 = sphi 0, %s97
      %s98 = sphi 0, %s95
      %s99 = sphi 0, %s98
      %s115 = sphi 0, %s99
      %s121 = sphi 0, %s123
      %s124 = sphi 0, %s121
      %s125 = sphi 0, %s124
      %s141 = sphi 0, %s125
    $region4: #{tpu_custom_call.1} parent=1 // loop_header_branch
      %20 = sbr.rel (%p18) target = $region8
    $region5: #{tpu_custom_call.1} parent=1 // loop_body
      %s22 = ssub.s32 %s17, 1
      %s23 = ssub.s32 %s17, 2
      %s24 = sadd.s32 %s17, 1
      %s25 = ssub.s32 %s17, %s24
      %p26 = scmp.eq.s32.totalorder %s25, 0
      %s28 = sadd.s32 %s27, 1
      %s29 = scalar_select %p26, %s27, %s28
      %p32 = pneg %p26
      %p33 = scmp.eq.s32.totalorder %s17, 1
      %p34 = por %p32, %p33
      %p35 = scmp.ne.s32.totalorder %s27, %s30
      %p36 = scmp.eq.s32.totalorder %s17, 0
      %p37 = por %p35, %p36
      %p38 = scmp.ne.s32.totalorder %s27, %s30
      %p39 = scmp.eq.s32.totalorder %s22, 1
      %p40 = por %p38, %p39
      %p41 = scmp.ne.s32.totalorder %s30, %s31
      %p42 = scmp.eq.s32.totalorder %s22, 0
      %p43 = por %p41, %p42
      %p44 = scmp.ne.s32.totalorder %s30, %s31
      %p45 = scmp.eq.s32.totalorder %s23, 1
      %p46 = por %p44, %p45
      %p48 = scmp.ne.s32.totalorder %s31, %s47
      %p49 = scmp.eq.s32.totalorder %s23, 0
      %p50 = por %p48, %p49
      %s52 = sadd.s32 %s51, 1
      %p55 = scmp.eq.s32.totalorder %s17, 1
      %p56 = scmp.ne.s32.totalorder %s51, %s53
      %p57 = scmp.eq.s32.totalorder %s17, 0
      %p58 = por %p56, %p57
      %p59 = scmp.ne.s32.totalorder %s51, %s53
      %p60 = scmp.eq.s32.totalorder %s22, 1
      %p61 = por %p59, %p60
      %p62 = scmp.ne.s32.totalorder %s53, %s54
      %p63 = scmp.eq.s32.totalorder %s22, 0
      %p64 = por %p62, %p63
      %p65 = scmp.ne.s32.totalorder %s53, %s54
      %p66 = scmp.eq.s32.totalorder %s23, 1
      %p67 = por %p65, %p66
      %p69 = scmp.ne.s32.totalorder %s54, %s68
      %p70 = scmp.eq.s32.totalorder %s23, 0
      %p71 = por %p69, %p70
      %s73 = sadd.s32 %s72, 1
      %p76 = scmp.eq.s32.totalorder %s17, 1
      %p77 = scmp.ne.s32.totalorder %s72, %s74
      %p78 = scmp.eq.s32.totalorder %s17, 0
      %p79 = por %p77, %p78
      %p80 = scmp.ne.s32.totalorder %s72, %s74
      %p81 = scmp.eq.s32.totalorder %s22, 1
      %p82 = por %p80, %p81
      %p83 = scmp.ne.s32.totalorder %s74, %s75
      %p84 = scmp.eq.s32.totalorder %s22, 0
      %p85 = por %p83, %p84
      %p86 = scmp.ne.s32.totalorder %s74, %s75
      %p87 = scmp.eq.s32.totalorder %s23, 1
      %p88 = por %p86, %p87
      %p90 = scmp.ne.s32.totalorder %s75, %s89
      %p91 = scmp.eq.s32.totalorder %s23, 0
      %p92 = por %p90, %p91
      %s93 = ssub.s32 %s17, %s24
      %p94 = scmp.eq.s32.totalorder %s93, 0
      %s96 = sadd.s32 %s95, 1
      %s97 = scalar_select %p94, %s95, %s96
      %p100 = pneg %p94
      %p101 = scmp.eq.s32.totalorder %s17, 1
      %p102 = por %p100, %p101
      %p103 = scmp.ne.s32.totalorder %s95, %s98
      %p104 = scmp.eq.s32.totalorder %s17, 0
      %p105 = por %p103, %p104
      %p106 = scmp.ne.s32.totalorder %s95, %s98
      %p107 = scmp.eq.s32.totalorder %s22, 1
      %p108 = por %p106, %p107
      %p109 = scmp.ne.s32.totalorder %s98, %s99
      %p110 = scmp.eq.s32.totalorder %s22, 0
      %p111 = por %p109, %p110
      %p112 = scmp.ne.s32.totalorder %s98, %s99
      %p113 = scmp.eq.s32.totalorder %s23, 1
      %p114 = por %p112, %p113
      %p116 = scmp.ne.s32.totalorder %s99, %s115
      %p117 = scmp.eq.s32.totalorder %s23, 0
      %p118 = por %p116, %p117
      %s119 = ssub.s32 %s17, %s24
      %p120 = scmp.eq.s32.totalorder %s119, 0
      %s122 = sadd.s32 %s121, 1
      %s123 = scalar_select %p120, %s121, %s122
      %p126 = pneg %p120
      %p127 = scmp.eq.s32.totalorder %s17, 1
      %p128 = por %p126, %p127
      %p129 = scmp.ne.s32.totalorder %s121, %s124
      %p130 = scmp.eq.s32.totalorder %s17, 0
      %p131 = por %p129, %p130
      %p132 = scmp.ne.s32.totalorder %s121, %s124
      %p133 = scmp.eq.s32.totalorder %s22, 1
      %p134 = por %p132, %p133
      %p135 = scmp.ne.s32.totalorder %s124, %s125
      %p136 = scmp.eq.s32.totalorder %s22, 0
      %p137 = por %p135, %p136
      %p138 = scmp.ne.s32.totalorder %s124, %s125
      %p139 = scmp.eq.s32.totalorder %s23, 1
      %p140 = por %p138, %p139
      %p142 = scmp.ne.s32.totalorder %s125, %s141
      %p143 = scmp.eq.s32.totalorder %s23, 0
      %p144 = por %p142, %p143
      %p145 = scmp.le.s32.totalorder 1, %s17
      %p146 = scmp.lt.s32.totalorder %s17, 3
      %p147 = pnand %p145, %p146
      %p148 = pneg %p147
      // Predicated region
      $region9: #{tpu_custom_call.1} parent=5 // pred_check
        _
      $region10: #{tpu_custom_call.1} parent=5 // pred_check_branch
        %150 = sbr.rel (%p147) target = $region12
      $region11: #{tpu_custom_call.1} parent=5 // pred_region
        %s151 = ssub.s32 %s17, 1
        // Predicated region
        $region13: #{tpu_custom_call.1} parent=11 // pred_check
          %p152 = pneg %p64
        $region14: #{tpu_custom_call.1} parent=11 // pred_check_branch
          %154 = sbr.rel (%p152) target = $region16
        $region15: #{tpu_custom_call.1} parent=11 // pred_region
          _
        $region16: #{tpu_custom_call.1} parent=11 // pred_fallthru
          _
        // Predicated region
        $region17: #{tpu_custom_call.1} parent=11 // pred_check
          %p155 = pneg %p85
        $region18: #{tpu_custom_call.1} parent=11 // pred_check_branch
          %157 = sbr.rel (%p155) target = $region20
        $region19: #{tpu_custom_call.1} parent=11 // pred_region
          _
        $region20: #{tpu_custom_call.1} parent=11 // pred_fallthru
          _
      $region12: #{tpu_custom_call.1} parent=5 // pred_fallthru
        _
      %p158 = scmp.lt.s32.totalorder %s17, 2
      // Predicated region
      $region21: #{tpu_custom_call.1} parent=5 // pred_check
        %p159 = pneg %p158
      $region22: #{tpu_custom_call.1} parent=5 // pred_check_branch
        %161 = sbr.rel (%p159) target = $region24
      $region23: #{tpu_custom_call.1} parent=5 // pred_region
        // Predicated region
        $region25: #{tpu_custom_call.1} parent=23 // pred_check
          %p162 = pneg %p37
        $region26: #{tpu_custom_call.1} parent=23 // pred_check_branch
          %164 = sbr.rel (%p162) target = $region28
        $region27: #{tpu_custom_call.1} parent=23 // pred_region
          %s165 = smul.u32 256, %s17
          %p166 = scmp.lt.s32.totalorder %s165, 511
          %s167 = scalar_select %p166, %s165, 511
          %s168 = smul.addr %s167, 4
          %s169 = scalar_lea.vmem %s0, %s168
          %s170 = smul.u32 256, %s17
        $region28: #{tpu_custom_call.1} parent=23 // pred_fallthru
          _
      $region24: #{tpu_custom_call.1} parent=5 // pred_fallthru
        _
      %p171 = scmp.le.s32.totalorder 1, %s17
      %p172 = scmp.lt.s32.totalorder %s17, 3
      %p173 = pnand %p171, %p172
      %p174 = pneg %p173
      // Predicated region
      $region29: #{tpu_custom_call.1} parent=5 // pred_check
        _
      $region30: #{tpu_custom_call.1} parent=5 // pred_check_branch
        %176 = sbr.rel (%p173) target = $region32
      $region31: #{tpu_custom_call.1} parent=5 // pred_region
        %s177 = ssub.s32 %s17, 1
        %s178 = smul.u32 256, %s22
        %p179 = scmp.lt.s32.totalorder %s178, 511
        %s180 = scalar_select %p179, %s178, 511
        %s181 = smul.addr %s180, 4
        %s182 = scalar_lea.vmem %s0, %s181
        %p183 = pneg %p43
        %p184 = pneg %p40
        %p185 = pneg %p64
        %p186 = pneg %p61
        %p187 = pneg %p85
        %p188 = pneg %p82
        %p189 = pneg %p111
        %p190 = pneg %p108
        %s191 = sand.u32 %s98, 1
        %s192 = scalar_lea.sflag [#allocation3], %s191
        %s193 = sand.u32 %s98, 1
        %s194 = smul.addr %s193, 8
        %s195 = scalar_lea.vmem [#allocation2], %s194
        %p196 = pneg %p137
        %p197 = pneg %p134
        %s198 = sand.u32 %s124, 1
        %s199 = scalar_lea.sflag [#allocation5], %s198
        %s200 = sand.u32 %s124, 1
        %s201 = smul.addr %s200, 8
        %s202 = scalar_lea.vmem [#allocation4], %s201
        %s203 = smul.u32 256, %s22
        %p204 = scmp.lt.s32.totalorder %s203, 511
        %s205 = scalar_select %p204, %s203, 511
        %s206 = smul.addr %s205, 4
        %s207 = scalar_lea.vmem %s0, %s206
        %s208 = smul.u32 256, %s22
        %v210 = vld [vmem:[%s207] sm:$0xf]
        %v211 = vld [vmem:[%s207 + $0x4] sm:$0xf]
        %v212 = vld [vmem:[%s207 + $0x8] sm:$0xf]
        %v213 = vld [vmem:[%s207 + $0xc] sm:$0xf]
        %v214 = vld [vmem:[%s207 + $0x10] sm:$0xf]
        %v215 = vld [vmem:[%s207 + $0x14] sm:$0xf]
        %v216 = vld [vmem:[%s207 + $0x18] sm:$0xf]
        %v217 = vld [vmem:[%s207 + $0x1c] sm:$0xf]
        %v218 = vld [vmem:[%s207 + $0x20] sm:$0xf]
        %v219 = vld [vmem:[%s207 + $0x24] sm:$0xf]
        %v220 = vld [vmem:[%s207 + $0x28] sm:$0xf]
        %v221 = vld [vmem:[%s207 + $0x2c] sm:$0xf]
        %v222 = vld [vmem:[%s207 + $0x30] sm:$0xf]
        %v223 = vld [vmem:[%s207 + $0x34] sm:$0xf]
        %v224 = vld [vmem:[%s207 + $0x38] sm:$0xf]
        %v225 = vld [vmem:[%s207 + $0x3c] sm:$0xf]
        %v226 = vld [vmem:[%s207 + $0x40] sm:$0xf]
        %v227 = vld [vmem:[%s207 + $0x44] sm:$0xf]
        %v228 = vld [vmem:[%s207 + $0x48] sm:$0xf]
        %v229 = vld [vmem:[%s207 + $0x4c] sm:$0xf]
        %v230 = vld [vmem:[%s207 + $0x50] sm:$0xf]
        %v231 = vld [vmem:[%s207 + $0x54] sm:$0xf]
        %v232 = vld [vmem:[%s207 + $0x58] sm:$0xf]
        %v233 = vld [vmem:[%s207 + $0x5c] sm:$0xf]
        %v234 = vld [vmem:[%s207 + $0x60] sm:$0xf]
        %v235 = vld [vmem:[%s207 + $0x64] sm:$0xf]
        %v236 = vld [vmem:[%s207 + $0x68] sm:$0xf]
        %v237 = vld [vmem:[%s207 + $0x6c] sm:$0xf]
        %v238 = vld [vmem:[%s207 + $0x70] sm:$0xf]
        %v239 = vld [vmem:[%s207 + $0x74] sm:$0xf]
        %v240 = vld [vmem:[%s207 + $0x78] sm:$0xf]
        %v241 = vld [vmem:[%s207 + $0x7c] sm:$0xf]
        %v242 = vld [vmem:[%s207 + $0x80] sm:$0xf]
        %v243 = vld [vmem:[%s207 + $0x84] sm:$0xf]
        %v244 = vld [vmem:[%s207 + $0x88] sm:$0xf]
        %v245 = vld [vmem:[%s207 + $0x8c] sm:$0xf]
        %v246 = vld [vmem:[%s207 + $0x90] sm:$0xf]
        %v247 = vld [vmem:[%s207 + $0x94] sm:$0xf]
        %v248 = vld [vmem:[%s207 + $0x98] sm:$0xf]
        %v249 = vld [vmem:[%s207 + $0x9c] sm:$0xf]
        %v250 = vld [vmem:[%s207 + $0xa0] sm:$0xf]
        %v251 = vld [vmem:[%s207 + $0xa4] sm:$0xf]
        %v252 = vld [vmem:[%s207 + $0xa8] sm:$0xf]
        %v253 = vld [vmem:[%s207 + $0xac] sm:$0xf]
        %v254 = vld [vmem:[%s207 + $0xb0] sm:$0xf]
        %v255 = vld [vmem:[%s207 + $0xb4] sm:$0xf]
        %v256 = vld [vmem:[%s207 + $0xb8] sm:$0xf]
        %v257 = vld [vmem:[%s207 + $0xbc] sm:$0xf]
        %v258 = vld [vmem:[%s207 + $0xc0] sm:$0xf]
        %v259 = vld [vmem:[%s207 + $0xc4] sm:$0xf]
        %v260 = vld [vmem:[%s207 + $0xc8] sm:$0xf]
        %v261 = vld [vmem:[%s207 + $0xcc] sm:$0xf]
        %v262 = vld [vmem:[%s207 + $0xd0] sm:$0xf]
        %v263 = vld [vmem:[%s207 + $0xd4] sm:$0xf]
        %v264 = vld [vmem:[%s207 + $0xd8] sm:$0xf]
        %v265 = vld [vmem:[%s207 + $0xdc] sm:$0xf]
        %v266 = vld [vmem:[%s207 + $0xe0] sm:$0xf]
        %v267 = vld [vmem:[%s207 + $0xe4] sm:$0xf]
        %v268 = vld [vmem:[%s207 + $0xe8] sm:$0xf]
        %v269 = vld [vmem:[%s207 + $0xec] sm:$0xf]
        %v270 = vld [vmem:[%s207 + $0xf0] sm:$0xf]
        %v271 = vld [vmem:[%s207 + $0xf4] sm:$0xf]
        %v272 = vld [vmem:[%s207 + $0xf8] sm:$0xf]
        %v273 = vld [vmem:[%s207 + $0xfc] sm:$0xf]
        %v274 = vld [vmem:[%s207 + $0x100] sm:$0xf]
        %v275 = vld [vmem:[%s207 + $0x104] sm:$0xf]
        %v276 = vld [vmem:[%s207 + $0x108] sm:$0xf]
        %v277 = vld [vmem:[%s207 + $0x10c] sm:$0xf]
        %v278 = vld [vmem:[%s207 + $0x110] sm:$0xf]
        %v279 = vld [vmem:[%s207 + $0x114] sm:$0xf]
        %v280 = vld [vmem:[%s207 + $0x118] sm:$0xf]
        %v281 = vld [vmem:[%s207 + $0x11c] sm:$0xf]
        %v282 = vld [vmem:[%s207 + $0x120] sm:$0xf]
        %v283 = vld [vmem:[%s207 + $0x124] sm:$0xf]
        %v284 = vld [vmem:[%s207 + $0x128] sm:$0xf]
        %v285 = vld [vmem:[%s207 + $0x12c] sm:$0xf]
        %v286 = vld [vmem:[%s207 + $0x130] sm:$0xf]
        %v287 = vld [vmem:[%s207 + $0x134] sm:$0xf]
        %v288 = vld [vmem:[%s207 + $0x138] sm:$0xf]
        %v289 = vld [vmem:[%s207 + $0x13c] sm:$0xf]
        %v290 = vld [vmem:[%s207 + $0x140] sm:$0xf]
        %v291 = vld [vmem:[%s207 + $0x144] sm:$0xf]
        %v292 = vld [vmem:[%s207 + $0x148] sm:$0xf]
        %v293 = vld [vmem:[%s207 + $0x14c] sm:$0xf]
        %v294 = vld [vmem:[%s207 + $0x150] sm:$0xf]
        %v295 = vld [vmem:[%s207 + $0x154] sm:$0xf]
        %v296 = vld [vmem:[%s207 + $0x158] sm:$0xf]
        %v297 = vld [vmem:[%s207 + $0x15c] sm:$0xf]
        %v298 = vld [vmem:[%s207 + $0x160] sm:$0xf]
        %v299 = vld [vmem:[%s207 + $0x164] sm:$0xf]
        %v300 = vld [vmem:[%s207 + $0x168] sm:$0xf]
        %v301 = vld [vmem:[%s207 + $0x16c] sm:$0xf]
        %v302 = vld [vmem:[%s207 + $0x170] sm:$0xf]
        %v303 = vld [vmem:[%s207 + $0x174] sm:$0xf]
        %v304 = vld [vmem:[%s207 + $0x178] sm:$0xf]
        %v305 = vld [vmem:[%s207 + $0x17c] sm:$0xf]
        %v306 = vld [vmem:[%s207 + $0x180] sm:$0xf]
        %v307 = vld [vmem:[%s207 + $0x184] sm:$0xf]
        %v308 = vld [vmem:[%s207 + $0x188] sm:$0xf]
        %v309 = vld [vmem:[%s207 + $0x18c] sm:$0xf]
        %v310 = vld [vmem:[%s207 + $0x190] sm:$0xf]
        %v311 = vld [vmem:[%s207 + $0x194] sm:$0xf]
        %v312 = vld [vmem:[%s207 + $0x198] sm:$0xf]
        %v313 = vld [vmem:[%s207 + $0x19c] sm:$0xf]
        %v314 = vld [vmem:[%s207 + $0x1a0] sm:$0xf]
        %v315 = vld [vmem:[%s207 + $0x1a4] sm:$0xf]
        %v316 = vld [vmem:[%s207 + $0x1a8] sm:$0xf]
        %v317 = vld [vmem:[%s207 + $0x1ac] sm:$0xf]
        %v318 = vld [vmem:[%s207 + $0x1b0] sm:$0xf]
        %v319 = vld [vmem:[%s207 + $0x1b4] sm:$0xf]
        %v320 = vld [vmem:[%s207 + $0x1b8] sm:$0xf]
        %v321 = vld [vmem:[%s207 + $0x1bc] sm:$0xf]
        %v322 = vld [vmem:[%s207 + $0x1c0] sm:$0xf]
        %v323 = vld [vmem:[%s207 + $0x1c4] sm:$0xf]
        %v324 = vld [vmem:[%s207 + $0x1c8] sm:$0xf]
        %v325 = vld [vmem:[%s207 + $0x1cc] sm:$0xf]
        %v326 = vld [vmem:[%s207 + $0x1d0] sm:$0xf]
        %v327 = vld [vmem:[%s207 + $0x1d4] sm:$0xf]
        %v328 = vld [vmem:[%s207 + $0x1d8] sm:$0xf]
        %v329 = vld [vmem:[%s207 + $0x1dc] sm:$0xf]
        %v330 = vld [vmem:[%s207 + $0x1e0] sm:$0xf]
        %v331 = vld [vmem:[%s207 + $0x1e4] sm:$0xf]
        %v332 = vld [vmem:[%s207 + $0x1e8] sm:$0xf]
        %v333 = vld [vmem:[%s207 + $0x1ec] sm:$0xf]
        %v334 = vld [vmem:[%s207 + $0x1f0] sm:$0xf]
        %v335 = vld [vmem:[%s207 + $0x1f4] sm:$0xf]
        %v336 = vld [vmem:[%s207 + $0x1f8] sm:$0xf]
        %v337 = vld [vmem:[%s207 + $0x1fc] sm:$0xf]
        %v338 = vld [vmem:[%s207 + $0x200] sm:$0xf]
        %v339 = vld [vmem:[%s207 + $0x204] sm:$0xf]
        %v340 = vld [vmem:[%s207 + $0x208] sm:$0xf]
        %v341 = vld [vmem:[%s207 + $0x20c] sm:$0xf]
        %v342 = vld [vmem:[%s207 + $0x210] sm:$0xf]
        %v343 = vld [vmem:[%s207 + $0x214] sm:$0xf]
        %v344 = vld [vmem:[%s207 + $0x218] sm:$0xf]
        %v345 = vld [vmem:[%s207 + $0x21c] sm:$0xf]
        %v346 = vld [vmem:[%s207 + $0x220] sm:$0xf]
        %v347 = vld [vmem:[%s207 + $0x224] sm:$0xf]
        %v348 = vld [vmem:[%s207 + $0x228] sm:$0xf]
        %v349 = vld [vmem:[%s207 + $0x22c] sm:$0xf]
        %v350 = vld [vmem:[%s207 + $0x230] sm:$0xf]
        %v351 = vld [vmem:[%s207 + $0x234] sm:$0xf]
        %v352 = vld [vmem:[%s207 + $0x238] sm:$0xf]
        %v353 = vld [vmem:[%s207 + $0x23c] sm:$0xf]
        %v354 = vld [vmem:[%s207 + $0x240] sm:$0xf]
        %v355 = vld [vmem:[%s207 + $0x244] sm:$0xf]
        %v356 = vld [vmem:[%s207 + $0x248] sm:$0xf]
        %v357 = vld [vmem:[%s207 + $0x24c] sm:$0xf]
        %v358 = vld [vmem:[%s207 + $0x250] sm:$0xf]
        %v359 = vld [vmem:[%s207 + $0x254] sm:$0xf]
        %v360 = vld [vmem:[%s207 + $0x258] sm:$0xf]
        %v361 = vld [vmem:[%s207 + $0x25c] sm:$0xf]
        %v362 = vld [vmem:[%s207 + $0x260] sm:$0xf]
        %v363 = vld [vmem:[%s207 + $0x264] sm:$0xf]
        %v364 = vld [vmem:[%s207 + $0x268] sm:$0xf]
        %v365 = vld [vmem:[%s207 + $0x26c] sm:$0xf]
        %v366 = vld [vmem:[%s207 + $0x270] sm:$0xf]
        %v367 = vld [vmem:[%s207 + $0x274] sm:$0xf]
        %v368 = vld [vmem:[%s207 + $0x278] sm:$0xf]
        %v369 = vld [vmem:[%s207 + $0x27c] sm:$0xf]
        %v370 = vld [vmem:[%s207 + $0x280] sm:$0xf]
        %v371 = vld [vmem:[%s207 + $0x284] sm:$0xf]
        %v372 = vld [vmem:[%s207 + $0x288] sm:$0xf]
        %v373 = vld [vmem:[%s207 + $0x28c] sm:$0xf]
        %v374 = vld [vmem:[%s207 + $0x290] sm:$0xf]
        %v375 = vld [vmem:[%s207 + $0x294] sm:$0xf]
        %v376 = vld [vmem:[%s207 + $0x298] sm:$0xf]
        %v377 = vld [vmem:[%s207 + $0x29c] sm:$0xf]
        %v378 = vld [vmem:[%s207 + $0x2a0] sm:$0xf]
        %v379 = vld [vmem:[%s207 + $0x2a4] sm:$0xf]
        %v380 = vld [vmem:[%s207 + $0x2a8] sm:$0xf]
        %v381 = vld [vmem:[%s207 + $0x2ac] sm:$0xf]
        %v382 = vld [vmem:[%s207 + $0x2b0] sm:$0xf]
        %v383 = vld [vmem:[%s207 + $0x2b4] sm:$0xf]
        %v384 = vld [vmem:[%s207 + $0x2b8] sm:$0xf]
        %v385 = vld [vmem:[%s207 + $0x2bc] sm:$0xf]
        %v386 = vld [vmem:[%s207 + $0x2c0] sm:$0xf]
        %v387 = vld [vmem:[%s207 + $0x2c4] sm:$0xf]
        %v388 = vld [vmem:[%s207 + $0x2c8] sm:$0xf]
        %v389 = vld [vmem:[%s207 + $0x2cc] sm:$0xf]
        %v390 = vld [vmem:[%s207 + $0x2d0] sm:$0xf]
        %v391 = vld [vmem:[%s207 + $0x2d4] sm:$0xf]
        %v392 = vld [vmem:[%s207 + $0x2d8] sm:$0xf]
        %v393 = vld [vmem:[%s207 + $0x2dc] sm:$0xf]
        %v394 = vld [vmem:[%s207 + $0x2e0] sm:$0xf]
        %v395 = vld [vmem:[%s207 + $0x2e4] sm:$0xf]
        %v396 = vld [vmem:[%s207 + $0x2e8] sm:$0xf]
        %v397 = vld [vmem:[%s207 + $0x2ec] sm:$0xf]
        %v398 = vld [vmem:[%s207 + $0x2f0] sm:$0xf]
        %v399 = vld [vmem:[%s207 + $0x2f4] sm:$0xf]
        %v400 = vld [vmem:[%s207 + $0x2f8] sm:$0xf]
        %v401 = vld [vmem:[%s207 + $0x2fc] sm:$0xf]
        %v402 = vld [vmem:[%s207 + $0x300] sm:$0xf]
        %v403 = vld [vmem:[%s207 + $0x304] sm:$0xf]
        %v404 = vld [vmem:[%s207 + $0x308] sm:$0xf]
        %v405 = vld [vmem:[%s207 + $0x30c] sm:$0xf]
        %v406 = vld [vmem:[%s207 + $0x310] sm:$0xf]
        %v407 = vld [vmem:[%s207 + $0x314] sm:$0xf]
        %v408 = vld [vmem:[%s207 + $0x318] sm:$0xf]
        %v409 = vld [vmem:[%s207 + $0x31c] sm:$0xf]
        %v410 = vld [vmem:[%s207 + $0x320] sm:$0xf]
        %v411 = vld [vmem:[%s207 + $0x324] sm:$0xf]
        %v412 = vld [vmem:[%s207 + $0x328] sm:$0xf]
        %v413 = vld [vmem:[%s207 + $0x32c] sm:$0xf]
        %v414 = vld [vmem:[%s207 + $0x330] sm:$0xf]
        %v415 = vld [vmem:[%s207 + $0x334] sm:$0xf]
        %v416 = vld [vmem:[%s207 + $0x338] sm:$0xf]
        %v417 = vld [vmem:[%s207 + $0x33c] sm:$0xf]
        %v418 = vld [vmem:[%s207 + $0x340] sm:$0xf]
        %v419 = vld [vmem:[%s207 + $0x344] sm:$0xf]
        %v420 = vld [vmem:[%s207 + $0x348] sm:$0xf]
        %v421 = vld [vmem:[%s207 + $0x34c] sm:$0xf]
        %v422 = vld [vmem:[%s207 + $0x350] sm:$0xf]
        %v423 = vld [vmem:[%s207 + $0x354] sm:$0xf]
        %v424 = vld [vmem:[%s207 + $0x358] sm:$0xf]
        %v425 = vld [vmem:[%s207 + $0x35c] sm:$0xf]
        %v426 = vld [vmem:[%s207 + $0x360] sm:$0xf]
        %v427 = vld [vmem:[%s207 + $0x364] sm:$0xf]
        %v428 = vld [vmem:[%s207 + $0x368] sm:$0xf]
        %v429 = vld [vmem:[%s207 + $0x36c] sm:$0xf]
        %v430 = vld [vmem:[%s207 + $0x370] sm:$0xf]
        %v431 = vld [vmem:[%s207 + $0x374] sm:$0xf]
        %v432 = vld [vmem:[%s207 + $0x378] sm:$0xf]
        %v433 = vld [vmem:[%s207 + $0x37c] sm:$0xf]
        %v434 = vld [vmem:[%s207 + $0x380] sm:$0xf]
        %v435 = vld [vmem:[%s207 + $0x384] sm:$0xf]
        %v436 = vld [vmem:[%s207 + $0x388] sm:$0xf]
        %v437 = vld [vmem:[%s207 + $0x38c] sm:$0xf]
        %v438 = vld [vmem:[%s207 + $0x390] sm:$0xf]
        %v439 = vld [vmem:[%s207 + $0x394] sm:$0xf]
        %v440 = vld [vmem:[%s207 + $0x398] sm:$0xf]
        %v441 = vld [vmem:[%s207 + $0x39c] sm:$0xf]
        %v442 = vld [vmem:[%s207 + $0x3a0] sm:$0xf]
        %v443 = vld [vmem:[%s207 + $0x3a4] sm:$0xf]
        %v444 = vld [vmem:[%s207 + $0x3a8] sm:$0xf]
        %v445 = vld [vmem:[%s207 + $0x3ac] sm:$0xf]
        %v446 = vld [vmem:[%s207 + $0x3b0] sm:$0xf]
        %v447 = vld [vmem:[%s207 + $0x3b4] sm:$0xf]
        %v448 = vld [vmem:[%s207 + $0x3b8] sm:$0xf]
        %v449 = vld [vmem:[%s207 + $0x3bc] sm:$0xf]
        %v450 = vld [vmem:[%s207 + $0x3c0] sm:$0xf]
        %v451 = vld [vmem:[%s207 + $0x3c4] sm:$0xf]
        %v452 = vld [vmem:[%s207 + $0x3c8] sm:$0xf]
        %v453 = vld [vmem:[%s207 + $0x3cc] sm:$0xf]
        %v454 = vld [vmem:[%s207 + $0x3d0] sm:$0xf]
        %v455 = vld [vmem:[%s207 + $0x3d4] sm:$0xf]
        %v456 = vld [vmem:[%s207 + $0x3d8] sm:$0xf]
        %v457 = vld [vmem:[%s207 + $0x3dc] sm:$0xf]
        %v458 = vld [vmem:[%s207 + $0x3e0] sm:$0xf]
        %v459 = vld [vmem:[%s207 + $0x3e4] sm:$0xf]
        %v460 = vld [vmem:[%s207 + $0x3e8] sm:$0xf]
        %v461 = vld [vmem:[%s207 + $0x3ec] sm:$0xf]
        %v462 = vld [vmem:[%s207 + $0x3f0] sm:$0xf]
        %v463 = vld [vmem:[%s207 + $0x3f4] sm:$0xf]
        %v464 = vld [vmem:[%s207 + $0x3f8] sm:$0xf]
        %v465 = vld [vmem:[%s207 + $0x3fc] sm:$0xf]
        %v466 = vld [vmem:[%s1] sm:$0xf]
        %v467 = vld [vmem:[%s1 + $0x4] sm:$0xf]
        %v468 = vld [vmem:[%s1 + $0x8] sm:$0xf]
        %v469 = vld [vmem:[%s1 + $0xc] sm:$0xf]
        %v470 = vld [vmem:[%s1 + $0x10] sm:$0x3]
        %v727 = vunpack.c.l.b16 %v210
        %v728 = vunpack.c.l.b16 %v211
        %v729 = vunpack.c.l.b16 %v212
        %v730 = vunpack.c.l.b16 %v213
        %v731 = vunpack.c.l.b16 %v214
        %v732 = vunpack.c.l.b16 %v215
        %v733 = vunpack.c.l.b16 %v216
        %v734 = vunpack.c.l.b16 %v217
        %v735 = vunpack.c.l.b16 %v218
        %v736 = vunpack.c.l.b16 %v219
        %v737 = vunpack.c.l.b16 %v220
        %v738 = vunpack.c.l.b16 %v221
        %v739 = vunpack.c.l.b16 %v222
        %v740 = vunpack.c.l.b16 %v223
        %v741 = vunpack.c.l.b16 %v224
        %v742 = vunpack.c.l.b16 %v225
        %v743 = vunpack.c.l.b16 %v226
        %v744 = vunpack.c.l.b16 %v227
        %v745 = vunpack.c.l.b16 %v228
        %v746 = vunpack.c.l.b16 %v229
        %v747 = vunpack.c.l.b16 %v230
        %v748 = vunpack.c.l.b16 %v231
        %v749 = vunpack.c.l.b16 %v232
        %v750 = vunpack.c.l.b16 %v233
        %v751 = vunpack.c.l.b16 %v234
        %v752 = vunpack.c.l.b16 %v235
        %v753 = vunpack.c.l.b16 %v236
        %v754 = vunpack.c.l.b16 %v237
        %v755 = vunpack.c.l.b16 %v238
        %v756 = vunpack.c.l.b16 %v239
        %v757 = vunpack.c.l.b16 %v240
        %v758 = vunpack.c.l.b16 %v241
        %v759 = vunpack.c.l.b16 %v242
        %v760 = vunpack.c.l.b16 %v243
        %v761 = vunpack.c.l.b16 %v244
        %v762 = vunpack.c.l.b16 %v245
        %v763 = vunpack.c.l.b16 %v246
        %v764 = vunpack.c.l.b16 %v247
        %v765 = vunpack.c.l.b16 %v248
        %v766 = vunpack.c.l.b16 %v249
        %v767 = vunpack.c.l.b16 %v250
        %v768 = vunpack.c.l.b16 %v251
        %v769 = vunpack.c.l.b16 %v252
        %v770 = vunpack.c.l.b16 %v253
        %v771 = vunpack.c.l.b16 %v254
        %v772 = vunpack.c.l.b16 %v255
        %v773 = vunpack.c.l.b16 %v256
        %v774 = vunpack.c.l.b16 %v257
        %v775 = vunpack.c.l.b16 %v258
        %v776 = vunpack.c.l.b16 %v259
        %v777 = vunpack.c.l.b16 %v260
        %v778 = vunpack.c.l.b16 %v261
        %v779 = vunpack.c.l.b16 %v262
        %v780 = vunpack.c.l.b16 %v263
        %v781 = vunpack.c.l.b16 %v264
        %v782 = vunpack.c.l.b16 %v265
        %v783 = vunpack.c.l.b16 %v266
        %v784 = vunpack.c.l.b16 %v267
        %v785 = vunpack.c.l.b16 %v268
        %v786 = vunpack.c.l.b16 %v269
        %v787 = vunpack.c.l.b16 %v270
        %v788 = vunpack.c.l.b16 %v271
        %v789 = vunpack.c.l.b16 %v272
        %v790 = vunpack.c.l.b16 %v273
        %v791 = vunpack.c.l.b16 %v274
        %v792 = vunpack.c.l.b16 %v275
        %v793 = vunpack.c.l.b16 %v276
        %v794 = vunpack.c.l.b16 %v277
        %v795 = vunpack.c.l.b16 %v278
        %v796 = vunpack.c.l.b16 %v279
        %v797 = vunpack.c.l.b16 %v280
        %v798 = vunpack.c.l.b16 %v281
        %v799 = vunpack.c.l.b16 %v282
        %v800 = vunpack.c.l.b16 %v283
        %v801 = vunpack.c.l.b16 %v284
        %v802 = vunpack.c.l.b16 %v285
        %v803 = vunpack.c.l.b16 %v286
        %v804 = vunpack.c.l.b16 %v287
        %v805 = vunpack.c.l.b16 %v288
        %v806 = vunpack.c.l.b16 %v289
        %v807 = vunpack.c.l.b16 %v290
        %v808 = vunpack.c.l.b16 %v291
        %v809 = vunpack.c.l.b16 %v292
        %v810 = vunpack.c.l.b16 %v293
        %v811 = vunpack.c.l.b16 %v294
        %v812 = vunpack.c.l.b16 %v295
        %v813 = vunpack.c.l.b16 %v296
        %v814 = vunpack.c.l.b16 %v297
        %v815 = vunpack.c.l.b16 %v298
        %v816 = vunpack.c.l.b16 %v299
        %v817 = vunpack.c.l.b16 %v300
        %v818 = vunpack.c.l.b16 %v301
        %v819 = vunpack.c.l.b16 %v302
        %v820 = vunpack.c.l.b16 %v303
        %v821 = vunpack.c.l.b16 %v304
        %v822 = vunpack.c.l.b16 %v305
        %v823 = vunpack.c.l.b16 %v306
        %v824 = vunpack.c.l.b16 %v307
        %v825 = vunpack.c.l.b16 %v308
        %v826 = vunpack.c.l.b16 %v309
        %v827 = vunpack.c.l.b16 %v310
        %v828 = vunpack.c.l.b16 %v311
        %v829 = vunpack.c.l.b16 %v312
        %v830 = vunpack.c.l.b16 %v313
        %v831 = vunpack.c.l.b16 %v314
        %v832 = vunpack.c.l.b16 %v315
        %v833 = vunpack.c.l.b16 %v316
        %v834 = vunpack.c.l.b16 %v317
        %v835 = vunpack.c.l.b16 %v318
        %v836 = vunpack.c.l.b16 %v319
        %v837 = vunpack.c.l.b16 %v320
        %v838 = vunpack.c.l.b16 %v321
        %v839 = vunpack.c.l.b16 %v322
        %v840 = vunpack.c.l.b16 %v323
        %v841 = vunpack.c.l.b16 %v324
        %v842 = vunpack.c.l.b16 %v325
        %v843 = vunpack.c.l.b16 %v326
        %v844 = vunpack.c.l.b16 %v327
        %v845 = vunpack.c.l.b16 %v328
        %v846 = vunpack.c.l.b16 %v329
        %v847 = vunpack.c.l.b16 %v330
        %v848 = vunpack.c.l.b16 %v331
        %v849 = vunpack.c.l.b16 %v332
        %v850 = vunpack.c.l.b16 %v333
        %v851 = vunpack.c.l.b16 %v334
        %v852 = vunpack.c.l.b16 %v335
        %v853 = vunpack.c.l.b16 %v336
        %v854 = vunpack.c.l.b16 %v337
        %v855 = vunpack.c.l.b16 %v338
        %v856 = vunpack.c.l.b16 %v339
        %v857 = vunpack.c.l.b16 %v340
        %v858 = vunpack.c.l.b16 %v341
        %v859 = vunpack.c.l.b16 %v342
        %v860 = vunpack.c.l.b16 %v343
        %v861 = vunpack.c.l.b16 %v344
        %v862 = vunpack.c.l.b16 %v345
        %v863 = vunpack.c.l.b16 %v346
        %v864 = vunpack.c.l.b16 %v347
        %v865 = vunpack.c.l.b16 %v348
        %v866 = vunpack.c.l.b16 %v349
        %v867 = vunpack.c.l.b16 %v350
        %v868 = vunpack.c.l.b16 %v351
        %v869 = vunpack.c.l.b16 %v352
        %v870 = vunpack.c.l.b16 %v353
        %v871 = vunpack.c.l.b16 %v354
        %v872 = vunpack.c.l.b16 %v355
        %v873 = vunpack.c.l.b16 %v356
        %v874 = vunpack.c.l.b16 %v357
        %v875 = vunpack.c.l.b16 %v358
        %v876 = vunpack.c.l.b16 %v359
        %v877 = vunpack.c.l.b16 %v360
        %v878 = vunpack.c.l.b16 %v361
        %v879 = vunpack.c.l.b16 %v362
        %v880 = vunpack.c.l.b16 %v363
        %v881 = vunpack.c.l.b16 %v364
        %v882 = vunpack.c.l.b16 %v365
        %v883 = vunpack.c.l.b16 %v366
        %v884 = vunpack.c.l.b16 %v367
        %v885 = vunpack.c.l.b16 %v368
        %v886 = vunpack.c.l.b16 %v369
        %v887 = vunpack.c.l.b16 %v370
        %v888 = vunpack.c.l.b16 %v371
        %v889 = vunpack.c.l.b16 %v372
        %v890 = vunpack.c.l.b16 %v373
        %v891 = vunpack.c.l.b16 %v374
        %v892 = vunpack.c.l.b16 %v375
        %v893 = vunpack.c.l.b16 %v376
        %v894 = vunpack.c.l.b16 %v377
        %v895 = vunpack.c.l.b16 %v378
        %v896 = vunpack.c.l.b16 %v379
        %v897 = vunpack.c.l.b16 %v380
        %v898 = vunpack.c.l.b16 %v381
        %v899 = vunpack.c.l.b16 %v382
        %v900 = vunpack.c.l.b16 %v383
        %v901 = vunpack.c.l.b16 %v384
        %v902 = vunpack.c.l.b16 %v385
        %v903 = vunpack.c.l.b16 %v386
        %v904 = vunpack.c.l.b16 %v387
        %v905 = vunpack.c.l.b16 %v388
        %v906 = vunpack.c.l.b16 %v389
        %v907 = vunpack.c.l.b16 %v390
        %v908 = vunpack.c.l.b16 %v391
        %v909 = vunpack.c.l.b16 %v392
        %v910 = vunpack.c.l.b16 %v393
        %v911 = vunpack.c.l.b16 %v394
        %v912 = vunpack.c.l.b16 %v395
        %v913 = vunpack.c.l.b16 %v396
        %v914 = vunpack.c.l.b16 %v397
        %v915 = vunpack.c.l.b16 %v398
        %v916 = vunpack.c.l.b16 %v399
        %v917 = vunpack.c.l.b16 %v400
        %v918 = vunpack.c.l.b16 %v401
        %v919 = vunpack.c.l.b16 %v402
        %v920 = vunpack.c.l.b16 %v403
        %v921 = vunpack.c.l.b16 %v404
        %v922 = vunpack.c.l.b16 %v405
        %v923 = vunpack.c.l.b16 %v406
        %v924 = vunpack.c.l.b16 %v407
        %v925 = vunpack.c.l.b16 %v408
        %v926 = vunpack.c.l.b16 %v409
        %v927 = vunpack.c.l.b16 %v410
        %v928 = vunpack.c.l.b16 %v411
        %v929 = vunpack.c.l.b16 %v412
        %v930 = vunpack.c.l.b16 %v413
        %v931 = vunpack.c.l.b16 %v414
        %v932 = vunpack.c.l.b16 %v415
        %v933 = vunpack.c.l.b16 %v416
        %v934 = vunpack.c.l.b16 %v417
        %v935 = vunpack.c.l.b16 %v418
        %v936 = vunpack.c.l.b16 %v419
        %v937 = vunpack.c.l.b16 %v420
        %v938 = vunpack.c.l.b16 %v421
        %v939 = vunpack.c.l.b16 %v422
        %v940 = vunpack.c.l.b16 %v423
        %v941 = vunpack.c.l.b16 %v424
        %v942 = vunpack.c.l.b16 %v425
        %v943 = vunpack.c.l.b16 %v426
        %v944 = vunpack.c.l.b16 %v427
        %v945 = vunpack.c.l.b16 %v428
        %v946 = vunpack.c.l.b16 %v429
        %v947 = vunpack.c.l.b16 %v430
        %v948 = vunpack.c.l.b16 %v431
        %v949 = vunpack.c.l.b16 %v432
        %v950 = vunpack.c.l.b16 %v433
        %v951 = vunpack.c.l.b16 %v434
        %v952 = vunpack.c.l.b16 %v435
        %v953 = vunpack.c.l.b16 %v436
        %v954 = vunpack.c.l.b16 %v437
        %v955 = vunpack.c.l.b16 %v438
        %v956 = vunpack.c.l.b16 %v439
        %v957 = vunpack.c.l.b16 %v440
        %v958 = vunpack.c.l.b16 %v441
        %v959 = vunpack.c.l.b16 %v442
        %v960 = vunpack.c.l.b16 %v443
        %v961 = vunpack.c.l.b16 %v444
        %v962 = vunpack.c.l.b16 %v445
        %v963 = vunpack.c.l.b16 %v446
        %v964 = vunpack.c.l.b16 %v447
        %v965 = vunpack.c.l.b16 %v448
        %v966 = vunpack.c.l.b16 %v449
        %v967 = vunpack.c.l.b16 %v450
        %v968 = vunpack.c.l.b16 %v451
        %v969 = vunpack.c.l.b16 %v452
        %v970 = vunpack.c.l.b16 %v453
        %v971 = vunpack.c.l.b16 %v454
        %v972 = vunpack.c.l.b16 %v455
        %v973 = vunpack.c.l.b16 %v456
        %v974 = vunpack.c.l.b16 %v457
        %v975 = vunpack.c.l.b16 %v458
        %v976 = vunpack.c.l.b16 %v459
        %v977 = vunpack.c.l.b16 %v460
        %v978 = vunpack.c.l.b16 %v461
        %v979 = vunpack.c.l.b16 %v462
        %v980 = vunpack.c.l.b16 %v463
        %v981 = vunpack.c.l.b16 %v464
        %v982 = vunpack.c.l.b16 %v465
        %v983 = vpack.c.b16 %v728, %v727
        %v984 = vpack.c.b16 %v730, %v729
        %v985 = vpack.c.b16 %v732, %v731
        %v986 = vpack.c.b16 %v734, %v733
        %v987 = vpack.c.b16 %v736, %v735
        %v988 = vpack.c.b16 %v738, %v737
        %v989 = vpack.c.b16 %v740, %v739
        %v990 = vpack.c.b16 %v742, %v741
        %v991 = vpack.c.b16 %v744, %v743
        %v992 = vpack.c.b16 %v746, %v745
        %v993 = vpack.c.b16 %v748, %v747
        %v994 = vpack.c.b16 %v750, %v749
        %v995 = vpack.c.b16 %v752, %v751
        %v996 = vpack.c.b16 %v754, %v753
        %v997 = vpack.c.b16 %v756, %v755
        %v998 = vpack.c.b16 %v758, %v757
        %v999 = vpack.c.b16 %v760, %v759
        %v1000 = vpack.c.b16 %v762, %v761
        %v1001 = vpack.c.b16 %v764, %v763
        %v1002 = vpack.c.b16 %v766, %v765
        %v1003 = vpack.c.b16 %v768, %v767
        %v1004 = vpack.c.b16 %v770, %v769
        %v1005 = vpack.c.b16 %v772, %v771
        %v1006 = vpack.c.b16 %v774, %v773
        %v1007 = vpack.c.b16 %v776, %v775
        %v1008 = vpack.c.b16 %v778, %v777
        %v1009 = vpack.c.b16 %v780, %v779
        %v1010 = vpack.c.b16 %v782, %v781
        %v1011 = vpack.c.b16 %v784, %v783
        %v1012 = vpack.c.b16 %v786, %v785
        %v1013 = vpack.c.b16 %v788, %v787
        %v1014 = vpack.c.b16 %v790, %v789
        %v1015 = vpack.c.b16 %v792, %v791
        %v1016 = vpack.c.b16 %v794, %v793
        %v1017 = vpack.c.b16 %v796, %v795
        %v1018 = vpack.c.b16 %v798, %v797
        %v1019 = vpack.c.b16 %v800, %v799
        %v1020 = vpack.c.b16 %v802, %v801
        %v1021 = vpack.c.b16 %v804, %v803
        %v1022 = vpack.c.b16 %v806, %v805
        %v1023 = vpack.c.b16 %v808, %v807
        %v1024 = vpack.c.b16 %v810, %v809
        %v1025 = vpack.c.b16 %v812, %v811
        %v1026 = vpack.c.b16 %v814, %v813
        %v1027 = vpack.c.b16 %v816, %v815
        %v1028 = vpack.c.b16 %v818, %v817
        %v1029 = vpack.c.b16 %v820, %v819
        %v1030 = vpack.c.b16 %v822, %v821
        %v1031 = vpack.c.b16 %v824, %v823
        %v1032 = vpack.c.b16 %v826, %v825
        %v1033 = vpack.c.b16 %v828, %v827
        %v1034 = vpack.c.b16 %v830, %v829
        %v1035 = vpack.c.b16 %v832, %v831
        %v1036 = vpack.c.b16 %v834, %v833
        %v1037 = vpack.c.b16 %v836, %v835
        %v1038 = vpack.c.b16 %v838, %v837
        %v1039 = vpack.c.b16 %v840, %v839
        %v1040 = vpack.c.b16 %v842, %v841
        %v1041 = vpack.c.b16 %v844, %v843
        %v1042 = vpack.c.b16 %v846, %v845
        %v1043 = vpack.c.b16 %v848, %v847
        %v1044 = vpack.c.b16 %v850, %v849
        %v1045 = vpack.c.b16 %v852, %v851
        %v1046 = vpack.c.b16 %v854, %v853
        %v1047 = vpack.c.b16 %v856, %v855
        %v1048 = vpack.c.b16 %v858, %v857
        %v1049 = vpack.c.b16 %v860, %v859
        %v1050 = vpack.c.b16 %v862, %v861
        %v1051 = vpack.c.b16 %v864, %v863
        %v1052 = vpack.c.b16 %v866, %v865
        %v1053 = vpack.c.b16 %v868, %v867
        %v1054 = vpack.c.b16 %v870, %v869
        %v1055 = vpack.c.b16 %v872, %v871
        %v1056 = vpack.c.b16 %v874, %v873
        %v1057 = vpack.c.b16 %v876, %v875
        %v1058 = vpack.c.b16 %v878, %v877
        %v1059 = vpack.c.b16 %v880, %v879
        %v1060 = vpack.c.b16 %v882, %v881
        %v1061 = vpack.c.b16 %v884, %v883
        %v1062 = vpack.c.b16 %v886, %v885
        %v1063 = vpack.c.b16 %v888, %v887
        %v1064 = vpack.c.b16 %v890, %v889
        %v1065 = vpack.c.b16 %v892, %v891
        %v1066 = vpack.c.b16 %v894, %v893
        %v1067 = vpack.c.b16 %v896, %v895
        %v1068 = vpack.c.b16 %v898, %v897
        %v1069 = vpack.c.b16 %v900, %v899
        %v1070 = vpack.c.b16 %v902, %v901
        %v1071 = vpack.c.b16 %v904, %v903
        %v1072 = vpack.c.b16 %v906, %v905
        %v1073 = vpack.c.b16 %v908, %v907
        %v1074 = vpack.c.b16 %v910, %v909
        %v1075 = vpack.c.b16 %v912, %v911
        %v1076 = vpack.c.b16 %v914, %v913
        %v1077 = vpack.c.b16 %v916, %v915
        %v1078 = vpack.c.b16 %v918, %v917
        %v1079 = vpack.c.b16 %v920, %v919
        %v1080 = vpack.c.b16 %v922, %v921
        %v1081 = vpack.c.b16 %v924, %v923
        %v1082 = vpack.c.b16 %v926, %v925
        %v1083 = vpack.c.b16 %v928, %v927
        %v1084 = vpack.c.b16 %v930, %v929
        %v1085 = vpack.c.b16 %v932, %v931
        %v1086 = vpack.c.b16 %v934, %v933
        %v1087 = vpack.c.b16 %v936, %v935
        %v1088 = vpack.c.b16 %v938, %v937
        %v1089 = vpack.c.b16 %v940, %v939
        %v1090 = vpack.c.b16 %v942, %v941
        %v1091 = vpack.c.b16 %v944, %v943
        %v1092 = vpack.c.b16 %v946, %v945
        %v1093 = vpack.c.b16 %v948, %v947
        %v1094 = vpack.c.b16 %v950, %v949
        %v1095 = vpack.c.b16 %v952, %v951
        %v1096 = vpack.c.b16 %v954, %v953
        %v1097 = vpack.c.b16 %v956, %v955
        %v1098 = vpack.c.b16 %v958, %v957
        %v1099 = vpack.c.b16 %v960, %v959
        %v1100 = vpack.c.b16 %v962, %v961
        %v1101 = vpack.c.b16 %v964, %v963
        %v1102 = vpack.c.b16 %v966, %v965
        %v1103 = vpack.c.b16 %v968, %v967
        %v1104 = vpack.c.b16 %v970, %v969
        %v1105 = vpack.c.b16 %v972, %v971
        %v1106 = vpack.c.b16 %v974, %v973
        %v1107 = vpack.c.b16 %v976, %v975
        %v1108 = vpack.c.b16 %v978, %v977
        %v1109 = vpack.c.b16 %v980, %v979
        %v1110 = vpack.c.b16 %v982, %v981
        %v1116 = vunpack.c.l.b16 %v466
        %v1117 = vunpack.c.l.b16 %v467
        %v1118 = vunpack.c.l.b16 %v468
        %v1119 = vunpack.c.l.b16 %v469
        %v1120 = vunpack.c.l.b16 %v470
        %v1121 = vpack.c.b16 %v1117, %v1116
        %v1122 = vpack.c.b16 %v1119, %v1118
        %v1123 = vpack.c.b16 %v1120, %v1120
        %vm1126 = vcmask 293888
        %v1128 = vsel %vm1126, %v983, 0
        %v1131 = vsel %vm1126, %v984, 0
        %v1134 = vsel %vm1126, %v985, 0
        %v1137 = vsel %vm1126, %v986, 0
        %v1140 = vsel %vm1126, %v987, 0
        %v1143 = vsel %vm1126, %v988, 0
        %v1146 = vsel %vm1126, %v989, 0
        %v1149 = vsel %vm1126, %v990, 0
        %v1152 = vsel %vm1126, %v991, 0
        %v1155 = vsel %vm1126, %v992, 0
        %v1158 = vsel %vm1126, %v993, 0
        %v1161 = vsel %vm1126, %v994, 0
        %v1164 = vsel %vm1126, %v995, 0
        %v1167 = vsel %vm1126, %v996, 0
        %v1170 = vsel %vm1126, %v997, 0
        %v1173 = vsel %vm1126, %v998, 0
        %v1176 = vsel %vm1126, %v999, 0
        %v1179 = vsel %vm1126, %v1000, 0
        %v1182 = vsel %vm1126, %v1001, 0
        %v1185 = vsel %vm1126, %v1002, 0
        %v1188 = vsel %vm1126, %v1003, 0
        %v1191 = vsel %vm1126, %v1004, 0
        %v1194 = vsel %vm1126, %v1005, 0
        %v1197 = vsel %vm1126, %v1006, 0
        %v1200 = vsel %vm1126, %v1007, 0
        %v1203 = vsel %vm1126, %v1008, 0
        %v1206 = vsel %vm1126, %v1009, 0
        %v1209 = vsel %vm1126, %v1010, 0
        %v1212 = vsel %vm1126, %v1011, 0
        %v1215 = vsel %vm1126, %v1012, 0
        %v1218 = vsel %vm1126, %v1013, 0
        %v1221 = vsel %vm1126, %v1014, 0
        %v1224 = vsel %vm1126, %v1015, 0
        %v1227 = vsel %vm1126, %v1016, 0
        %v1230 = vsel %vm1126, %v1017, 0
        %v1233 = vsel %vm1126, %v1018, 0
        %v1236 = vsel %vm1126, %v1019, 0
        %v1239 = vsel %vm1126, %v1020, 0
        %v1242 = vsel %vm1126, %v1021, 0
        %v1245 = vsel %vm1126, %v1022, 0
        %v1248 = vsel %vm1126, %v1023, 0
        %v1251 = vsel %vm1126, %v1024, 0
        %v1254 = vsel %vm1126, %v1025, 0
        %v1257 = vsel %vm1126, %v1026, 0
        %v1260 = vsel %vm1126, %v1027, 0
        %v1263 = vsel %vm1126, %v1028, 0
        %v1266 = vsel %vm1126, %v1029, 0
        %v1269 = vsel %vm1126, %v1030, 0
        %v1272 = vsel %vm1126, %v1031, 0
        %v1275 = vsel %vm1126, %v1032, 0
        %v1278 = vsel %vm1126, %v1033, 0
        %v1281 = vsel %vm1126, %v1034, 0
        %v1284 = vsel %vm1126, %v1035, 0
        %v1287 = vsel %vm1126, %v1036, 0
        %v1290 = vsel %vm1126, %v1037, 0
        %v1293 = vsel %vm1126, %v1038, 0
        %v1296 = vsel %vm1126, %v1039, 0
        %v1299 = vsel %vm1126, %v1040, 0
        %v1302 = vsel %vm1126, %v1041, 0
        %v1305 = vsel %vm1126, %v1042, 0
        %v1308 = vsel %vm1126, %v1043, 0
        %v1311 = vsel %vm1126, %v1044, 0
        %v1314 = vsel %vm1126, %v1045, 0
        %v1317 = vsel %vm1126, %v1046, 0
        %v1320 = vsel %vm1126, %v1047, 0
        %v1323 = vsel %vm1126, %v1048, 0
        %v1326 = vsel %vm1126, %v1049, 0
        %v1329 = vsel %vm1126, %v1050, 0
        %v1332 = vsel %vm1126, %v1051, 0
        %v1335 = vsel %vm1126, %v1052, 0
        %v1338 = vsel %vm1126, %v1053, 0
        %v1341 = vsel %vm1126, %v1054, 0
        %v1344 = vsel %vm1126, %v1055, 0
        %v1347 = vsel %vm1126, %v1056, 0
        %v1350 = vsel %vm1126, %v1057, 0
        %v1353 = vsel %vm1126, %v1058, 0
        %v1356 = vsel %vm1126, %v1059, 0
        %v1359 = vsel %vm1126, %v1060, 0
        %v1362 = vsel %vm1126, %v1061, 0
        %v1365 = vsel %vm1126, %v1062, 0
        %v1368 = vsel %vm1126, %v1063, 0
        %v1371 = vsel %vm1126, %v1064, 0
        %v1374 = vsel %vm1126, %v1065, 0
        %v1377 = vsel %vm1126, %v1066, 0
        %v1380 = vsel %vm1126, %v1067, 0
        %v1383 = vsel %vm1126, %v1068, 0
        %v1386 = vsel %vm1126, %v1069, 0
        %v1389 = vsel %vm1126, %v1070, 0
        %v1392 = vsel %vm1126, %v1071, 0
        %v1395 = vsel %vm1126, %v1072, 0
        %v1398 = vsel %vm1126, %v1073, 0
        %v1401 = vsel %vm1126, %v1074, 0
        %v1404 = vsel %vm1126, %v1075, 0
        %v1407 = vsel %vm1126, %v1076, 0
        %v1410 = vsel %vm1126, %v1077, 0
        %v1413 = vsel %vm1126, %v1078, 0
        %v1416 = vsel %vm1126, %v1079, 0
        %v1419 = vsel %vm1126, %v1080, 0
        %v1422 = vsel %vm1126, %v1081, 0
        %v1425 = vsel %vm1126, %v1082, 0
        %v1428 = vsel %vm1126, %v1083, 0
        %v1431 = vsel %vm1126, %v1084, 0
        %v1434 = vsel %vm1126, %v1085, 0
        %v1437 = vsel %vm1126, %v1086, 0
        %v1440 = vsel %vm1126, %v1087, 0
        %v1443 = vsel %vm1126, %v1088, 0
        %v1446 = vsel %vm1126, %v1089, 0
        %v1449 = vsel %vm1126, %v1090, 0
        %v1452 = vsel %vm1126, %v1091, 0
        %v1455 = vsel %vm1126, %v1092, 0
        %v1458 = vsel %vm1126, %v1093, 0
        %v1461 = vsel %vm1126, %v1094, 0
        %v1464 = vsel %vm1126, %v1095, 0
        %v1467 = vsel %vm1126, %v1096, 0
        %v1470 = vsel %vm1126, %v1097, 0
        %v1473 = vsel %vm1126, %v1098, 0
        %v1476 = vsel %vm1126, %v1099, 0
        %v1479 = vsel %vm1126, %v1100, 0
        %v1482 = vsel %vm1126, %v1101, 0
        %v1485 = vsel %vm1126, %v1102, 0
        %v1488 = vsel %vm1126, %v1103, 0
        %v1491 = vsel %vm1126, %v1104, 0
        %v1494 = vsel %vm1126, %v1105, 0
        %v1497 = vsel %vm1126, %v1106, 0
        %v1500 = vsel %vm1126, %v1107, 0
        %v1503 = vsel %vm1126, %v1108, 0
        %v1506 = vsel %vm1126, %v1109, 0
        %v1509 = vsel %vm1126, %v1110, 0
        %vm1511 = vcmask 1041408
        %v1513 = vsel %vm1511, %v1123, 0
        %1515 = vmatprep.subr.bf16.mxu0 0
        %1516 = vmatpush1.bf16.msra.mxu0 %v1121
        %1517 = vmatprep.subr.bf16.mxu0 0
        %1518 = vmatpush1.bf16.msra.mxu0 %v1122
        %1519 = vmatprep.subr.bf16.mxu0 0
        %1520 = vmatpush1.bf16.msra.mxu0 %v1513
        %1521 = vmatprep.subr.bf16.mxu0 0
        %1522 = vmatpush1.bf16.msra.mxu0 0
        %1523 = vmatprep.subr.bf16.mxu0 0
        %1524 = vmatpush1.bf16.msra.mxu0 0
        %1525 = vmatprep.subr.bf16.mxu0 0
        %1526 = vmatpush1.bf16.msra.mxu0 0
        %1527 = vmatprep.subr.bf16.mxu0 0
        %1528 = vmatpush1.bf16.msra.mxu0 0
        %1529 = vmatprep.subr.bf16.mxu0 0
        %1530 = vmatpush1.bf16.msra.mxu0 0
        %1531 = vmatprep.subr.bf16.mxu0 0
        %1532 = vmatpush1.bf16.msra.mxu0 0
        %1533 = vmatprep.subr.bf16.mxu0 0
        %1534 = vmatpush1.bf16.msra.mxu0 0
        %1535 = vmatprep.subr.bf16.mxu0 0
        %1536 = vmatpush1.bf16.msra.mxu0 0
        %1537 = vmatprep.subr.bf16.mxu0 0
        %1538 = vmatpush1.bf16.msra.mxu0 0
        %1539 = vmatprep.subr.bf16.mxu0 0
        %1540 = vmatpush1.bf16.msra.mxu0 0
        %1541 = vmatprep.subr.bf16.mxu0 0
        %1542 = vmatpush1.bf16.msra.mxu0 0
        %1543 = vmatprep.subr.bf16.mxu0 0
        %1544 = vmatpush1.bf16.msra.mxu0 0
        %1545 = vmatprep.subr.bf16.mxu0 0
        %1546 = vmatpush1.bf16.msra.mxu0 0
        %1547 = vmatprep.mubr.bf16.mxu0 0
        %1548 = vmatmul.mubr.bf16.gmra.mrb[0].mxu0 %v1128
        %v1549 = vpop.f32.mrb[0].mxu0
        %v1550 = vadd.f32 0.0, %v1549
        %v1551 = vpop.f32.mrb[0].mxu0
        %v1552 = vpop.f32.mrb[0].mxu0
        %v1553 = vadd.f32 0.0, %v1552
        %v1554 = vpop.f32.mrb[0].mxu0
        %1555 = vmatprep.mubr.bf16.mxu0 0
        %1556 = vmatmul.mubr.bf16.gmra.mrb[0].mxu0 %v1131
        %v1557 = vpop.f32.mrb[0].mxu0
        %v1558 = vadd.f32 0.0, %v1557
        %v1559 = vpop.f32.mrb[0].mxu0
        %v1560 = vpop.f32.mrb[0].mxu0
        %v1561 = vadd.f32 0.0, %v1560
        %v1562 = vpop.f32.mrb[0].mxu0
        %1563 = vmatprep.mubr.bf16.mxu0 0
        %1564 = vmatmul.mubr.bf16.gmra.mrb[0].mxu0 %v1134
        %v1565 = vpop.f32.mrb[0].mxu0
        %v1566 = vadd.f32 0.0, %v1565
        %v1567 = vpop.f32.mrb[0].mxu0
        %v1568 = vpop.f32.mrb[0].mxu0
        %v1569 = vadd.f32 0.0, %v1568
        %v1570 = vpop.f32.mrb[0].mxu0
        %1571 = vmatprep.mubr.bf16.mxu0 0
        %1572 = vmatmul.mubr.bf16.gmra.mrb[0].mxu0 %v1137
        %v1573 = vpop.f32.mrb[0].mxu0
        %v1574 = vadd.f32 0.0, %v1573
        %v1575 = vpop.f32.mrb[0].mxu0
        %v1576 = vpop.f32.mrb[0].mxu0
        %v1577 = vadd.f32 0.0, %v1576
        %v1578 = vpop.f32.mrb[0].mxu0
        %1579 = vmatprep.mubr.bf16.mxu0 0
        %1580 = vmatmul.mubr.bf16.gmra.mrb[0].mxu0 %v1140
        %v1581 = vpop.f32.mrb[0].mxu0
        %v1582 = vadd.f32 0.0, %v1581
        %v1583 = vpop.f32.mrb[0].mxu0
        %v1584 = vpop.f32.mrb[0].mxu0
        %v1585 = vadd.f32 0.0, %v1584
        %v1586 = vpop.f32.mrb[0].mxu0
        %1587 = vmatprep.mubr.bf16.mxu0 0
        %1588 = vmatmul.mubr.bf16.gmra.mrb[0].mxu0 %v1143
        %v1589 = vpop.f32.mrb[0].mxu0
        %v1590 = vadd.f32 0.0, %v1589
        %v1591 = vpop.f32.mrb[0].mxu0
        %v1592 = vpop.f32.mrb[0].mxu0
        %v1593 = vadd.f32 0.0, %v1592
        %v1594 = vpop.f32.mrb[0].mxu0
        %1595 = vmatprep.mubr.bf16.mxu0 0
        %1596 = vmatmul.mubr.bf16.gmra.mrb[0].mxu0 %v1146
        %v1597 = vpop.f32.mrb[0].mxu0
        %v1598 = vadd.f32 0.0, %v1597
        %v1599 = vpop.f32.mrb[0].mxu0
        %v1600 = vpop.f32.mrb[0].mxu0
        %v1601 = vadd.f32 0.0, %v1600
        %v1602 = vpop.f32.mrb[0].mxu0
        %1603 = vmatprep.mubr.bf16.mxu0 0
        %1604 = vmatmul.mubr.bf16.gmra.mrb[0].mxu0 %v1149
        %v1605 = vpop.f32.mrb[0].mxu0
        %v1606 = vadd.f32 0.0, %v1605
        %v1607 = vpop.f32.mrb[0].mxu0
        %v1608 = vpop.f32.mrb[0].mxu0
        %v1609 = vadd.f32 0.0, %v1608
        %v1610 = vpop.f32.mrb[0].mxu0
        %1611 = vmatprep.mubr.bf16.mxu0 0
        %1612 = vmatmul.mubr.bf16.gmra.mrb[0].mxu0 %v1152
        %v1613 = vpop.f32.mrb[0].mxu0
        %v1614 = vadd.f32 0.0, %v1613
        %v1615 = vpop.f32.mrb[0].mxu0
        %v1616 = vpop.f32.mrb[0].mxu0
        %v1617 = vadd.f32 0.0, %v1616
        %v1618 = vpop.f32.mrb[0].mxu0
        %1619 = vmatprep.mubr.bf16.mxu0 0
        %1620 = vmatmul.mubr.bf16.gmra.mrb[0].mxu0 %v1155
        %v1621 = vpop.f32.mrb[0].mxu0
        %v1622 = vadd.f32 0.0, %v1621
        %v1623 = vpop.f32.mrb[0].mxu0
        %v1624 = vpop.f32.mrb[0].mxu0
        %v1625 = vadd.f32 0.0, %v1624
        %v1626 = vpop.f32.mrb[0].mxu0
        %1627 = vmatprep.mubr.bf16.mxu0 0
        %1628 = vmatmul.mubr.bf16.gmra.mrb[0].mxu0 %v1158
        %v1629 = vpop.f32.mrb[0].mxu0
        %v1630 = vadd.f32 0.0, %v1629
        %v1631 = vpop.f32.mrb[0].mxu0
        %v1632 = vpop.f32.mrb[0].mxu0
        %v1633 = vadd.f32 0.0, %v1632
        %v1634 = vpop.f32.mrb[0].mxu0
        %1635 = vmatprep.mubr.bf16.mxu0 0
        %1636 = vmatmul.mubr.bf16.gmra.mrb[0].mxu0 %v1161
        %v1637 = vpop.f32.mrb[0].mxu0
        %v1638 = vadd.f32 0.0, %v1637
        %v1639 = vpop.f32.mrb[0].mxu0
        %v1640 = vpop.f32.mrb[0].mxu0
        %v1641 = vadd.f32 0.0, %v1640
        %v1642 = vpop.f32.mrb[0].mxu0
        %1643 = vmatprep.mubr.bf16.mxu0 0
        %1644 = vmatmul.mubr.bf16.gmra.mrb[0].mxu0 %v1164
        %v1645 = vpop.f32.mrb[0].mxu0
        %v1646 = vadd.f32 0.0, %v1645
        %v1647 = vpop.f32.mrb[0].mxu0
        %v1648 = vpop.f32.mrb[0].mxu0
        %v1649 = vadd.f32 0.0, %v1648
        %v1650 = vpop.f32.mrb[0].mxu0
        %1651 = vmatprep.mubr.bf16.mxu0 0
        %1652 = vmatmul.mubr.bf16.gmra.mrb[0].mxu0 %v1167
        %v1653 = vpop.f32.mrb[0].mxu0
        %v1654 = vadd.f32 0.0, %v1653
        %v1655 = vpop.f32.mrb[0].mxu0
        %v1656 = vpop.f32.mrb[0].mxu0
        %v1657 = vadd.f32 0.0, %v1656
        %v1658 = vpop.f32.mrb[0].mxu0
        %1659 = vmatprep.mubr.bf16.mxu0 0
        %1660 = vmatmul.mubr.bf16.gmra.mrb[0].mxu0 %v1170
        %v1661 = vpop.f32.mrb[0].mxu0
        %v1662 = vadd.f32 0.0, %v1661
        %v1663 = vpop.f32.mrb[0].mxu0
        %v1664 = vpop.f32.mrb[0].mxu0
        %v1665 = vadd.f32 0.0, %v1664
        %v1666 = vpop.f32.mrb[0].mxu0
        %1667 = vmatprep.mubr.bf16.mxu0 0
        %1668 = vmatmul.mubr.bf16.gmra.mrb[0].mxu0 %v1173
        %v1669 = vpop.f32.mrb[0].mxu0
        %v1670 = vadd.f32 0.0, %v1669
        %v1671 = vpop.f32.mrb[0].mxu0
        %v1672 = vpop.f32.mrb[0].mxu0
        %v1673 = vadd.f32 0.0, %v1672
        %v1674 = vpop.f32.mrb[0].mxu0
        %1675 = vmatprep.mubr.bf16.mxu0 0
        %1676 = vmatmul.mubr.bf16.gmra.mrb[0].mxu0 %v1176
        %v1677 = vpop.f32.mrb[0].mxu0
        %v1678 = vadd.f32 0.0, %v1677
        %v1679 = vpop.f32.mrb[0].mxu0
        %v1680 = vpop.f32.mrb[0].mxu0
        %v1681 = vadd.f32 0.0, %v1680
        %v1682 = vpop.f32.mrb[0].mxu0
        %1683 = vmatprep.mubr.bf16.mxu0 0
        %1684 = vmatmul.mubr.bf16.gmra.mrb[0].mxu0 %v1179
        %v1685 = vpop.f32.mrb[0].mxu0
        %v1686 = vadd.f32 0.0, %v1685
        %v1687 = vpop.f32.mrb[0].mxu0
        %v1688 = vpop.f32.mrb[0].mxu0
        %v1689 = vadd.f32 0.0, %v1688
        %v1690 = vpop.f32.mrb[0].mxu0
        %1691 = vmatprep.mubr.bf16.mxu0 0
        %1692 = vmatmul.mubr.bf16.gmra.mrb[0].mxu0 %v1182
        %v1693 = vpop.f32.mrb[0].mxu0
        %v1694 = vadd.f32 0.0, %v1693
        %v1695 = vpop.f32.mrb[0].mxu0
        %v1696 = vpop.f32.mrb[0].mxu0
        %v1697 = vadd.f32 0.0, %v1696
        %v1698 = vpop.f32.mrb[0].mxu0
        %1699 = vmatprep.mubr.bf16.mxu0 0
        %1700 = vmatmul.mubr.bf16.gmra.mrb[0].mxu0 %v1185
        %v1701 = vpop.f32.mrb[0].mxu0
        %v1702 = vadd.f32 0.0, %v1701
        %v1703 = vpop.f32.mrb[0].mxu0
        %v1704 = vpop.f32.mrb[0].mxu0
        %v1705 = vadd.f32 0.0, %v1704
        %v1706 = vpop.f32.mrb[0].mxu0
        %1707 = vmatprep.mubr.bf16.mxu0 0
        %1708 = vmatmul.mubr.bf16.gmra.mrb[0].mxu0 %v1188
        %v1709 = vpop.f32.mrb[0].mxu0
        %v1710 = vadd.f32 0.0, %v1709
        %v1711 = vpop.f32.mrb[0].mxu0
        %v1712 = vpop.f32.mrb[0].mxu0
        %v1713 = vadd.f32 0.0, %v1712
        %v1714 = vpop.f32.mrb[0].mxu0
        %1715 = vmatprep.mubr.bf16.mxu0 0
        %1716 = vmatmul.mubr.bf16.gmra.mrb[0].mxu0 %v1191
        %v1717 = vpop.f32.mrb[0].mxu0
        %v1718 = vadd.f32 0.0, %v1717
        %v1719 = vpop.f32.mrb[0].mxu0
        %v1720 = vpop.f32.mrb[0].mxu0
        %v1721 = vadd.f32 0.0, %v1720
        %v1722 = vpop.f32.mrb[0].mxu0
        %1723 = vmatprep.mubr.bf16.mxu0 0
        %1724 = vmatmul.mubr.bf16.gmra.mrb[0].mxu0 %v1194
        %v1725 = vpop.f32.mrb[0].mxu0
        %v1726 = vadd.f32 0.0, %v1725
        %v1727 = vpop.f32.mrb[0].mxu0
        %v1728 = vpop.f32.mrb[0].mxu0
        %v1729 = vadd.f32 0.0, %v1728
        %v1730 = vpop.f32.mrb[0].mxu0
        %1731 = vmatprep.mubr.bf16.mxu0 0
        %1732 = vmatmul.mubr.bf16.gmra.mrb[0].mxu0 %v1197
        %v1733 = vpop.f32.mrb[0].mxu0
        %v1734 = vadd.f32 0.0, %v1733
        %v1735 = vpop.f32.mrb[0].mxu0
        %v1736 = vpop.f32.mrb[0].mxu0
        %v1737 = vadd.f32 0.0, %v1736
        %v1738 = vpop.f32.mrb[0].mxu0
        %1739 = vmatprep.mubr.bf16.mxu0 0
        %1740 = vmatmul.mubr.bf16.gmra.mrb[0].mxu0 %v1200
        %v1741 = vpop.f32.mrb[0].mxu0
        %v1742 = vadd.f32 0.0, %v1741
        %v1743 = vpop.f32.mrb[0].mxu0
        %v1744 = vpop.f32.mrb[0].mxu0
        %v1745 = vadd.f32 0.0, %v1744
        %v1746 = vpop.f32.mrb[0].mxu0
        %1747 = vmatprep.mubr.bf16.mxu0 0
        %1748 = vmatmul.mubr.bf16.gmra.mrb[0].mxu0 %v1203
        %v1749 = vpop.f32.mrb[0].mxu0
        %v1750 = vadd.f32 0.0, %v1749
        %v1751 = vpop.f32.mrb[0].mxu0
        %v1752 = vpop.f32.mrb[0].mxu0
        %v1753 = vadd.f32 0.0, %v1752
        %v1754 = vpop.f32.mrb[0].mxu0
        %1755 = vmatprep.mubr.bf16.mxu0 0
        %1756 = vmatmul.mubr.bf16.gmra.mrb[0].mxu0 %v1206
        %v1757 = vpop.f32.mrb[0].mxu0
        %v1758 = vadd.f32 0.0, %v1757
        %v1759 = vpop.f32.mrb[0].mxu0
        %v1760 = vpop.f32.mrb[0].mxu0
        %v1761 = vadd.f32 0.0, %v1760
        %v1762 = vpop.f32.mrb[0].mxu0
        %1763 = vmatprep.mubr.bf16.mxu0 0
        %1764 = vmatmul.mubr.bf16.gmra.mrb[0].mxu0 %v1209
        %v1765 = vpop.f32.mrb[0].mxu0
        %v1766 = vadd.f32 0.0, %v1765
        %v1767 = vpop.f32.mrb[0].mxu0
        %v1768 = vpop.f32.mrb[0].mxu0
        %v1769 = vadd.f32 0.0, %v1768
        %v1770 = vpop.f32.mrb[0].mxu0
        %1771 = vmatprep.mubr.bf16.mxu0 0
        %1772 = vmatmul.mubr.bf16.gmra.mrb[0].mxu0 %v1212
        %v1773 = vpop.f32.mrb[0].mxu0
        %v1774 = vadd.f32 0.0, %v1773
        %v1775 = vpop.f32.mrb[0].mxu0
        %v1776 = vpop.f32.mrb[0].mxu0
        %v1777 = vadd.f32 0.0, %v1776
        %v1778 = vpop.f32.mrb[0].mxu0
        %1779 = vmatprep.mubr.bf16.mxu0 0
        %1780 = vmatmul.mubr.bf16.gmra.mrb[0].mxu0 %v1215
        %v1781 = vpop.f32.mrb[0].mxu0
        %v1782 = vadd.f32 0.0, %v1781
        %v1783 = vpop.f32.mrb[0].mxu0
        %v1784 = vpop.f32.mrb[0].mxu0
        %v1785 = vadd.f32 0.0, %v1784
        %v1786 = vpop.f32.mrb[0].mxu0
        %1787 = vmatprep.mubr.bf16.mxu0 0
        %1788 = vmatmul.mubr.bf16.gmra.mrb[0].mxu0 %v1218
        %v1789 = vpop.f32.mrb[0].mxu0
        %v1790 = vadd.f32 0.0, %v1789
        %v1791 = vpop.f32.mrb[0].mxu0
        %v1792 = vpop.f32.mrb[0].mxu0
        %v1793 = vadd.f32 0.0, %v1792
        %v1794 = vpop.f32.mrb[0].mxu0
        %1795 = vmatprep.mubr.bf16.mxu0 0
        %1796 = vmatmul.mubr.bf16.gmra.mrb[0].mxu0 %v1221
        %v1797 = vpop.f32.mrb[0].mxu0
        %v1798 = vadd.f32 0.0, %v1797
        %v1799 = vpop.f32.mrb[0].mxu0
        %v1800 = vpop.f32.mrb[0].mxu0
        %v1801 = vadd.f32 0.0, %v1800
        %v1802 = vpop.f32.mrb[0].mxu0
        %1803 = vmatprep.mubr.bf16.mxu0 0
        %1804 = vmatmul.mubr.bf16.gmra.mrb[0].mxu0 %v1224
        %v1805 = vpop.f32.mrb[0].mxu0
        %v1806 = vadd.f32 0.0, %v1805
        %v1807 = vpop.f32.mrb[0].mxu0
        %v1808 = vpop.f32.mrb[0].mxu0
        %v1809 = vadd.f32 0.0, %v1808
        %v1810 = vpop.f32.mrb[0].mxu0
        %1811 = vmatprep.mubr.bf16.mxu0 0
        %1812 = vmatmul.mubr.bf16.gmra.mrb[0].mxu0 %v1227
        %v1813 = vpop.f32.mrb[0].mxu0
        %v1814 = vadd.f32 0.0, %v1813
        %v1815 = vpop.f32.mrb[0].mxu0
        %v1816 = vpop.f32.mrb[0].mxu0
        %v1817 = vadd.f32 0.0, %v1816
        %v1818 = vpop.f32.mrb[0].mxu0
        %1819 = vmatprep.mubr.bf16.mxu0 0
        %1820 = vmatmul.mubr.bf16.gmra.mrb[0].mxu0 %v1230
        %v1821 = vpop.f32.mrb[0].mxu0
        %v1822 = vadd.f32 0.0, %v1821
        %v1823 = vpop.f32.mrb[0].mxu0
        %v1824 = vpop.f32.mrb[0].mxu0
        %v1825 = vadd.f32 0.0, %v1824
        %v1826 = vpop.f32.mrb[0].mxu0
        %1827 = vmatprep.mubr.bf16.mxu0 0
        %1828 = vmatmul.mubr.bf16.gmra.mrb[0].mxu0 %v1233
        %v1829 = vpop.f32.mrb[0].mxu0
        %v1830 = vadd.f32 0.0, %v1829
        %v1831 = vpop.f32.mrb[0].mxu0
        %v1832 = vpop.f32.mrb[0].mxu0
        %v1833 = vadd.f32 0.0, %v1832
        %v1834 = vpop.f32.mrb[0].mxu0
        %1835 = vmatprep.mubr.bf16.mxu0 0
        %1836 = vmatmul.mubr.bf16.gmra.mrb[0].mxu0 %v1236
        %v1837 = vpop.f32.mrb[0].mxu0
        %v1838 = vadd.f32 0.0, %v1837
        %v1839 = vpop.f32.mrb[0].mxu0
        %v1840 = vpop.f32.mrb[0].mxu0
        %v1841 = vadd.f32 0.0, %v1840
        %v1842 = vpop.f32.mrb[0].mxu0
        %1843 = vmatprep.mubr.bf16.mxu0 0
        %1844 = vmatmul.mubr.bf16.gmra.mrb[0].mxu0 %v1239
        %v1845 = vpop.f32.mrb[0].mxu0
        %v1846 = vadd.f32 0.0, %v1845
        %v1847 = vpop.f32.mrb[0].mxu0
        %v1848 = vpop.f32.mrb[0].mxu0
        %v1849 = vadd.f32 0.0, %v1848
        %v1850 = vpop.f32.mrb[0].mxu0
        %1851 = vmatprep.mubr.bf16.mxu0 0
        %1852 = vmatmul.mubr.bf16.gmra.mrb[0].mxu0 %v1242
        %v1853 = vpop.f32.mrb[0].mxu0
        %v1854 = vadd.f32 0.0, %v1853
        %v1855 = vpop.f32.mrb[0].mxu0
        %v1856 = vpop.f32.mrb[0].mxu0
        %v1857 = vadd.f32 0.0, %v1856
        %v1858 = vpop.f32.mrb[0].mxu0
        %1859 = vmatprep.mubr.bf16.mxu0 0
        %1860 = vmatmul.mubr.bf16.gmra.mrb[0].mxu0 %v1245
        %v1861 = vpop.f32.mrb[0].mxu0
        %v1862 = vadd.f32 0.0, %v1861
        %v1863 = vpop.f32.mrb[0].mxu0
        %v1864 = vpop.f32.mrb[0].mxu0
        %v1865 = vadd.f32 0.0, %v1864
        %v1866 = vpop.f32.mrb[0].mxu0
        %1867 = vmatprep.mubr.bf16.mxu0 0
        %1868 = vmatmul.mubr.bf16.gmra.mrb[0].mxu0 %v1248
        %v1869 = vpop.f32.mrb[0].mxu0
        %v1870 = vadd.f32 0.0, %v1869
        %v1871 = vpop.f32.mrb[0].mxu0
        %v1872 = vpop.f32.mrb[0].mxu0
        %v1873 = vadd.f32 0.0, %v1872
        %v1874 = vpop.f32.mrb[0].mxu0
        %1875 = vmatprep.mubr.bf16.mxu0 0
        %1876 = vmatmul.mubr.bf16.gmra.mrb[0].mxu0 %v1251
        %v1877 = vpop.f32.mrb[0].mxu0
        %v1878 = vadd.f32 0.0, %v1877
        %v1879 = vpop.f32.mrb[0].mxu0
        %v1880 = vpop.f32.mrb[0].mxu0
        %v1881 = vadd.f32 0.0, %v1880
        %v1882 = vpop.f32.mrb[0].mxu0
        %1883 = vmatprep.mubr.bf16.mxu0 0
        %1884 = vmatmul.mubr.bf16.gmra.mrb[0].mxu0 %v1254
        %v1885 = vpop.f32.mrb[0].mxu0
        %v1886 = vadd.f32 0.0, %v1885
        %v1887 = vpop.f32.mrb[0].mxu0
        %v1888 = vpop.f32.mrb[0].mxu0
        %v1889 = vadd.f32 0.0, %v1888
        %v1890 = vpop.f32.mrb[0].mxu0
        %1891 = vmatprep.mubr.bf16.mxu0 0
        %1892 = vmatmul.mubr.bf16.gmra.mrb[0].mxu0 %v1257
        %v1893 = vpop.f32.mrb[0].mxu0
        %v1894 = vadd.f32 0.0, %v1893
        %v1895 = vpop.f32.mrb[0].mxu0
        %v1896 = vpop.f32.mrb[0].mxu0
        %v1897 = vadd.f32 0.0, %v1896
        %v1898 = vpop.f32.mrb[0].mxu0
        %1899 = vmatprep.mubr.bf16.mxu0 0
        %1900 = vmatmul.mubr.bf16.gmra.mrb[0].mxu0 %v1260
        %v1901 = vpop.f32.mrb[0].mxu0
        %v1902 = vadd.f32 0.0, %v1901
        %v1903 = vpop.f32.mrb[0].mxu0
        %v1904 = vpop.f32.mrb[0].mxu0
        %v1905 = vadd.f32 0.0, %v1904
        %v1906 = vpop.f32.mrb[0].mxu0
        %1907 = vmatprep.mubr.bf16.mxu0 0
        %1908 = vmatmul.mubr.bf16.gmra.mrb[0].mxu0 %v1263
        %v1909 = vpop.f32.mrb[0].mxu0
        %v1910 = vadd.f32 0.0, %v1909
        %v1911 = vpop.f32.mrb[0].mxu0
        %v1912 = vpop.f32.mrb[0].mxu0
        %v1913 = vadd.f32 0.0, %v1912
        %v1914 = vpop.f32.mrb[0].mxu0
        %1915 = vmatprep.mubr.bf16.mxu0 0
        %1916 = vmatmul.mubr.bf16.gmra.mrb[0].mxu0 %v1266
        %v1917 = vpop.f32.mrb[0].mxu0
        %v1918 = vadd.f32 0.0, %v1917
        %v1919 = vpop.f32.mrb[0].mxu0
        %v1920 = vpop.f32.mrb[0].mxu0
        %v1921 = vadd.f32 0.0, %v1920
        %v1922 = vpop.f32.mrb[0].mxu0
        %1923 = vmatprep.mubr.bf16.mxu0 0
        %1924 = vmatmul.mubr.bf16.gmra.mrb[0].mxu0 %v1269
        %v1925 = vpop.f32.mrb[0].mxu0
        %v1926 = vadd.f32 0.0, %v1925
        %v1927 = vpop.f32.mrb[0].mxu0
        %v1928 = vpop.f32.mrb[0].mxu0
        %v1929 = vadd.f32 0.0, %v1928
        %v1930 = vpop.f32.mrb[0].mxu0
        %1931 = vmatprep.mubr.bf16.mxu0 0
        %1932 = vmatmul.mubr.bf16.gmra.mrb[0].mxu0 %v1272
        %v1933 = vpop.f32.mrb[0].mxu0
        %v1934 = vadd.f32 0.0, %v1933
        %v1935 = vpop.f32.mrb[0].mxu0
        %v1936 = vpop.f32.mrb[0].mxu0
        %v1937 = vadd.f32 0.0, %v1936
        %v1938 = vpop.f32.mrb[0].mxu0
        %1939 = vmatprep.mubr.bf16.mxu0 0
        %1940 = vmatmul.mubr.bf16.gmra.mrb[0].mxu0 %v1275
        %v1941 = vpop.f32.mrb[0].mxu0
        %v1942 = vadd.f32 0.0, %v1941
        %v1943 = vpop.f32.mrb[0].mxu0
        %v1944 = vpop.f32.mrb[0].mxu0
        %v1945 = vadd.f32 0.0, %v1944
        %v1946 = vpop.f32.mrb[0].mxu0
        %1947 = vmatprep.mubr.bf16.mxu0 0
        %1948 = vmatmul.mubr.bf16.gmra.mrb[0].mxu0 %v1278
        %v1949 = vpop.f32.mrb[0].mxu0
        %v1950 = vadd.f32 0.0, %v1949
        %v1951 = vpop.f32.mrb[0].mxu0
        %v1952 = vpop.f32.mrb[0].mxu0
        %v1953 = vadd.f32 0.0, %v1952
        %v1954 = vpop.f32.mrb[0].mxu0
        %1955 = vmatprep.mubr.bf16.mxu0 0
        %1956 = vmatmul.mubr.bf16.gmra.mrb[0].mxu0 %v1281
        %v1957 = vpop.f32.mrb[0].mxu0
        %v1958 = vadd.f32 0.0, %v1957
        %v1959 = vpop.f32.mrb[0].mxu0
        %v1960 = vpop.f32.mrb[0].mxu0
        %v1961 = vadd.f32 0.0, %v1960
        %v1962 = vpop.f32.mrb[0].mxu0
        %1963 = vmatprep.mubr.bf16.mxu0 0
        %1964 = vmatmul.mubr.bf16.gmra.mrb[0].mxu0 %v1284
        %v1965 = vpop.f32.mrb[0].mxu0
        %v1966 = vadd.f32 0.0, %v1965
        %v1967 = vpop.f32.mrb[0].mxu0
        %v1968 = vpop.f32.mrb[0].mxu0
        %v1969 = vadd.f32 0.0, %v1968
        %v1970 = vpop.f32.mrb[0].mxu0
        %1971 = vmatprep.mubr.bf16.mxu0 0
        %1972 = vmatmul.mubr.bf16.gmra.mrb[0].mxu0 %v1287
        %v1973 = vpop.f32.mrb[0].mxu0
        %v1974 = vadd.f32 0.0, %v1973
        %v1975 = vpop.f32.mrb[0].mxu0
        %v1976 = vpop.f32.mrb[0].mxu0
        %v1977 = vadd.f32 0.0, %v1976
        %v1978 = vpop.f32.mrb[0].mxu0
        %1979 = vmatprep.mubr.bf16.mxu0 0
        %1980 = vmatmul.mubr.bf16.gmra.mrb[0].mxu0 %v1290
        %v1981 = vpop.f32.mrb[0].mxu0
        %v1982 = vadd.f32 0.0, %v1981
        %v1983 = vpop.f32.mrb[0].mxu0
        %v1984 = vpop.f32.mrb[0].mxu0
        %v1985 = vadd.f32 0.0, %v1984
        %v1986 = vpop.f32.mrb[0].mxu0
        %1987 = vmatprep.mubr.bf16.mxu0 0
        %1988 = vmatmul.mubr.bf16.gmra.mrb[0].mxu0 %v1293
        %v1989 = vpop.f32.mrb[0].mxu0
        %v1990 = vadd.f32 0.0, %v1989
        %v1991 = vpop.f32.mrb[0].mxu0
        %v1992 = vpop.f32.mrb[0].mxu0
        %v1993 = vadd.f32 0.0, %v1992
        %v1994 = vpop.f32.mrb[0].mxu0
        %1995 = vmatprep.mubr.bf16.mxu0 0
        %1996 = vmatmul.mubr.bf16.gmra.mrb[0].mxu0 %v1296
        %v1997 = vpop.f32.mrb[0].mxu0
        %v1998 = vadd.f32 0.0, %v1997
        %v1999 = vpop.f32.mrb[0].mxu0
        %v2000 = vpop.f32.mrb[0].mxu0
        %v2001 = vadd.f32 0.0, %v2000
        %v2002 = vpop.f32.mrb[0].mxu0
        %2003 = vmatprep.mubr.bf16.mxu0 0
        %2004 = vmatmul.mubr.bf16.gmra.mrb[0].mxu0 %v1299
        %v2005 = vpop.f32.mrb[0].mxu0
        %v2006 = vadd.f32 0.0, %v2005
        %v2007 = vpop.f32.mrb[0].mxu0
        %v2008 = vpop.f32.mrb[0].mxu0
        %v2009 = vadd.f32 0.0, %v2008
        %v2010 = vpop.f32.mrb[0].mxu0
        %2011 = vmatprep.mubr.bf16.mxu0 0
        %2012 = vmatmul.mubr.bf16.gmra.mrb[0].mxu0 %v1302
        %v2013 = vpop.f32.mrb[0].mxu0
        %v2014 = vadd.f32 0.0, %v2013
        %v2015 = vpop.f32.mrb[0].mxu0
        %v2016 = vpop.f32.mrb[0].mxu0
        %v2017 = vadd.f32 0.0, %v2016
        %v2018 = vpop.f32.mrb[0].mxu0
        %2019 = vmatprep.mubr.bf16.mxu0 0
        %2020 = vmatmul.mubr.bf16.gmra.mrb[0].mxu0 %v1305
        %v2021 = vpop.f32.mrb[0].mxu0
        %v2022 = vadd.f32 0.0, %v2021
        %v2023 = vpop.f32.mrb[0].mxu0
        %v2024 = vpop.f32.mrb[0].mxu0
        %v2025 = vadd.f32 0.0, %v2024
        %v2026 = vpop.f32.mrb[0].mxu0
        %2027 = vmatprep.mubr.bf16.mxu0 0
        %2028 = vmatmul.mubr.bf16.gmra.mrb[0].mxu0 %v1308
        %v2029 = vpop.f32.mrb[0].mxu0
        %v2030 = vadd.f32 0.0, %v2029
        %v2031 = vpop.f32.mrb[0].mxu0
        %v2032 = vpop.f32.mrb[0].mxu0
        %v2033 = vadd.f32 0.0, %v2032
        %v2034 = vpop.f32.mrb[0].mxu0
        %2035 = vmatprep.mubr.bf16.mxu0 0
        %2036 = vmatmul.mubr.bf16.gmra.mrb[0].mxu0 %v1311
        %v2037 = vpop.f32.mrb[0].mxu0
        %v2038 = vadd.f32 0.0, %v2037
        %v2039 = vpop.f32.mrb[0].mxu0
        %v2040 = vpop.f32.mrb[0].mxu0
        %v2041 = vadd.f32 0.0, %v2040
        %v2042 = vpop.f32.mrb[0].mxu0
        %2043 = vmatprep.mubr.bf16.mxu0 0
        %2044 = vmatmul.mubr.bf16.gmra.mrb[0].mxu0 %v1314
        %v2045 = vpop.f32.mrb[0].mxu0
        %v2046 = vadd.f32 0.0, %v2045
        %v2047 = vpop.f32.mrb[0].mxu0
        %v2048 = vpop.f32.mrb[0].mxu0
        %v2049 = vadd.f32 0.0, %v2048
        %v2050 = vpop.f32.mrb[0].mxu0
        %2051 = vmatprep.mubr.bf16.mxu0 0
        %2052 = vmatmul.mubr.bf16.gmra.mrb[0].mxu0 %v1317
        %v2053 = vpop.f32.mrb[0].mxu0
        %v2054 = vadd.f32 0.0, %v2053
        %v2055 = vpop.f32.mrb[0].mxu0
        %v2056 = vpop.f32.mrb[0].mxu0
        %v2057 = vadd.f32 0.0, %v2056
        %v2058 = vpop.f32.mrb[0].mxu0
        %2059 = vmatprep.mubr.bf16.mxu0 0
        %2060 = vmatmul.mubr.bf16.gmra.mrb[0].mxu0 %v1320
        %v2061 = vpop.f32.mrb[0].mxu0
        %v2062 = vadd.f32 0.0, %v2061
        %v2063 = vpop.f32.mrb[0].mxu0
        %v2064 = vpop.f32.mrb[0].mxu0
        %v2065 = vadd.f32 0.0, %v2064
        %v2066 = vpop.f32.mrb[0].mxu0
        %2067 = vmatprep.mubr.bf16.mxu0 0
        %2068 = vmatmul.mubr.bf16.gmra.mrb[0].mxu0 %v1323
        %v2069 = vpop.f32.mrb[0].mxu0
        %v2070 = vadd.f32 0.0, %v2069
        %v2071 = vpop.f32.mrb[0].mxu0
        %v2072 = vpop.f32.mrb[0].mxu0
        %v2073 = vadd.f32 0.0, %v2072
        %v2074 = vpop.f32.mrb[0].mxu0
        %2075 = vmatprep.mubr.bf16.mxu0 0
        %2076 = vmatmul.mubr.bf16.gmra.mrb[0].mxu0 %v1326
        %v2077 = vpop.f32.mrb[0].mxu0
        %v2078 = vadd.f32 0.0, %v2077
        %v2079 = vpop.f32.mrb[0].mxu0
        %v2080 = vpop.f32.mrb[0].mxu0
        %v2081 = vadd.f32 0.0, %v2080
        %v2082 = vpop.f32.mrb[0].mxu0
        %2083 = vmatprep.mubr.bf16.mxu0 0
        %2084 = vmatmul.mubr.bf16.gmra.mrb[0].mxu0 %v1329
        %v2085 = vpop.f32.mrb[0].mxu0
        %v2086 = vadd.f32 0.0, %v2085
        %v2087 = vpop.f32.mrb[0].mxu0
        %v2088 = vpop.f32.mrb[0].mxu0
        %v2089 = vadd.f32 0.0, %v2088
        %v2090 = vpop.f32.mrb[0].mxu0
        %2091 = vmatprep.mubr.bf16.mxu0 0
        %2092 = vmatmul.mubr.bf16.gmra.mrb[0].mxu0 %v1332
        %v2093 = vpop.f32.mrb[0].mxu0
        %v2094 = vadd.f32 0.0, %v2093
        %v2095 = vpop.f32.mrb[0].mxu0
        %v2096 = vpop.f32.mrb[0].mxu0
        %v2097 = vadd.f32 0.0, %v2096
        %v2098 = vpop.f32.mrb[0].mxu0
        %2099 = vmatprep.mubr.bf16.mxu0 0
        %2100 = vmatmul.mubr.bf16.gmra.mrb[0].mxu0 %v1335
        %v2101 = vpop.f32.mrb[0].mxu0
        %v2102 = vadd.f32 0.0, %v2101
        %v2103 = vpop.f32.mrb[0].mxu0
        %v2104 = vpop.f32.mrb[0].mxu0
        %v2105 = vadd.f32 0.0, %v2104
        %v2106 = vpop.f32.mrb[0].mxu0
        %2107 = vmatprep.mubr.bf16.mxu0 0
        %2108 = vmatmul.mubr.bf16.gmra.mrb[0].mxu0 %v1338
        %v2109 = vpop.f32.mrb[0].mxu0
        %v2110 = vadd.f32 0.0, %v2109
        %v2111 = vpop.f32.mrb[0].mxu0
        %v2112 = vpop.f32.mrb[0].mxu0
        %v2113 = vadd.f32 0.0, %v2112
        %v2114 = vpop.f32.mrb[0].mxu0
        %2115 = vmatprep.mubr.bf16.mxu0 0
        %2116 = vmatmul.mubr.bf16.gmra.mrb[0].mxu0 %v1341
        %v2117 = vpop.f32.mrb[0].mxu0
        %v2118 = vadd.f32 0.0, %v2117
        %v2119 = vpop.f32.mrb[0].mxu0
        %v2120 = vpop.f32.mrb[0].mxu0
        %v2121 = vadd.f32 0.0, %v2120
        %v2122 = vpop.f32.mrb[0].mxu0
        %2123 = vmatprep.mubr.bf16.mxu0 0
        %2124 = vmatmul.mubr.bf16.gmra.mrb[0].mxu0 %v1344
        %v2125 = vpop.f32.mrb[0].mxu0
        %v2126 = vadd.f32 0.0, %v2125
        %v2127 = vpop.f32.mrb[0].mxu0
        %v2128 = vpop.f32.mrb[0].mxu0
        %v2129 = vadd.f32 0.0, %v2128
        %v2130 = vpop.f32.mrb[0].mxu0
        %2131 = vmatprep.mubr.bf16.mxu0 0
        %2132 = vmatmul.mubr.bf16.gmra.mrb[0].mxu0 %v1347
        %v2133 = vpop.f32.mrb[0].mxu0
        %v2134 = vadd.f32 0.0, %v2133
        %v2135 = vpop.f32.mrb[0].mxu0
        %v2136 = vpop.f32.mrb[0].mxu0
        %v2137 = vadd.f32 0.0, %v2136
        %v2138 = vpop.f32.mrb[0].mxu0
        %2139 = vmatprep.mubr.bf16.mxu0 0
        %2140 = vmatmul.mubr.bf16.gmra.mrb[0].mxu0 %v1350
        %v2141 = vpop.f32.mrb[0].mxu0
        %v2142 = vadd.f32 0.0, %v2141
        %v2143 = vpop.f32.mrb[0].mxu0
        %v2144 = vpop.f32.mrb[0].mxu0
        %v2145 = vadd.f32 0.0, %v2144
        %v2146 = vpop.f32.mrb[0].mxu0
        %2147 = vmatprep.mubr.bf16.mxu0 0
        %2148 = vmatmul.mubr.bf16.gmra.mrb[0].mxu0 %v1353
        %v2149 = vpop.f32.mrb[0].mxu0
        %v2150 = vadd.f32 0.0, %v2149
        %v2151 = vpop.f32.mrb[0].mxu0
        %v2152 = vpop.f32.mrb[0].mxu0
        %v2153 = vadd.f32 0.0, %v2152
        %v2154 = vpop.f32.mrb[0].mxu0
        %2155 = vmatprep.mubr.bf16.mxu0 0
        %2156 = vmatmul.mubr.bf16.gmra.mrb[0].mxu0 %v1356
        %v2157 = vpop.f32.mrb[0].mxu0
        %v2158 = vadd.f32 0.0, %v2157
        %v2159 = vpop.f32.mrb[0].mxu0
        %v2160 = vpop.f32.mrb[0].mxu0
        %v2161 = vadd.f32 0.0, %v2160
        %v2162 = vpop.f32.mrb[0].mxu0
        %2163 = vmatprep.mubr.bf16.mxu0 0
        %2164 = vmatmul.mubr.bf16.gmra.mrb[0].mxu0 %v1359
        %v2165 = vpop.f32.mrb[0].mxu0
        %v2166 = vadd.f32 0.0, %v2165
        %v2167 = vpop.f32.mrb[0].mxu0
        %v2168 = vpop.f32.mrb[0].mxu0
        %v2169 = vadd.f32 0.0, %v2168
        %v2170 = vpop.f32.mrb[0].mxu0
        %2171 = vmatprep.mubr.bf16.mxu0 0
        %2172 = vmatmul.mubr.bf16.gmra.mrb[0].mxu0 %v1362
        %v2173 = vpop.f32.mrb[0].mxu0
        %v2174 = vadd.f32 0.0, %v2173
        %v2175 = vpop.f32.mrb[0].mxu0
        %v2176 = vpop.f32.mrb[0].mxu0
        %v2177 = vadd.f32 0.0, %v2176
        %v2178 = vpop.f32.mrb[0].mxu0
        %2179 = vmatprep.mubr.bf16.mxu0 0
        %2180 = vmatmul.mubr.bf16.gmra.mrb[0].mxu0 %v1365
        %v2181 = vpop.f32.mrb[0].mxu0
        %v2182 = vadd.f32 0.0, %v2181
        %v2183 = vpop.f32.mrb[0].mxu0
        %v2184 = vpop.f32.mrb[0].mxu0
        %v2185 = vadd.f32 0.0, %v2184
        %v2186 = vpop.f32.mrb[0].mxu0
        %2187 = vmatprep.mubr.bf16.mxu0 0
        %2188 = vmatmul.mubr.bf16.gmra.mrb[0].mxu0 %v1368
        %v2189 = vpop.f32.mrb[0].mxu0
        %v2190 = vadd.f32 0.0, %v2189
        %v2191 = vpop.f32.mrb[0].mxu0
        %v2192 = vpop.f32.mrb[0].mxu0
        %v2193 = vadd.f32 0.0, %v2192
        %v2194 = vpop.f32.mrb[0].mxu0
        %2195 = vmatprep.mubr.bf16.mxu0 0
        %2196 = vmatmul.mubr.bf16.gmra.mrb[0].mxu0 %v1371
        %v2197 = vpop.f32.mrb[0].mxu0
        %v2198 = vadd.f32 0.0, %v2197
        %v2199 = vpop.f32.mrb[0].mxu0
        %v2200 = vpop.f32.mrb[0].mxu0
        %v2201 = vadd.f32 0.0, %v2200
        %v2202 = vpop.f32.mrb[0].mxu0
        %2203 = vmatprep.mubr.bf16.mxu0 0
        %2204 = vmatmul.mubr.bf16.gmra.mrb[0].mxu0 %v1374
        %v2205 = vpop.f32.mrb[0].mxu0
        %v2206 = vadd.f32 0.0, %v2205
        %v2207 = vpop.f32.mrb[0].mxu0
        %v2208 = vpop.f32.mrb[0].mxu0
        %v2209 = vadd.f32 0.0, %v2208
        %v2210 = vpop.f32.mrb[0].mxu0
        %2211 = vmatprep.mubr.bf16.mxu0 0
        %2212 = vmatmul.mubr.bf16.gmra.mrb[0].mxu0 %v1377
        %v2213 = vpop.f32.mrb[0].mxu0
        %v2214 = vadd.f32 0.0, %v2213
        %v2215 = vpop.f32.mrb[0].mxu0
        %v2216 = vpop.f32.mrb[0].mxu0
        %v2217 = vadd.f32 0.0, %v2216
        %v2218 = vpop.f32.mrb[0].mxu0
        %2219 = vmatprep.mubr.bf16.mxu0 0
        %2220 = vmatmul.mubr.bf16.gmra.mrb[0].mxu0 %v1380
        %v2221 = vpop.f32.mrb[0].mxu0
        %v2222 = vadd.f32 0.0, %v2221
        %v2223 = vpop.f32.mrb[0].mxu0
        %v2224 = vpop.f32.mrb[0].mxu0
        %v2225 = vadd.f32 0.0, %v2224
        %v2226 = vpop.f32.mrb[0].mxu0
        %2227 = vmatprep.mubr.bf16.mxu0 0
        %2228 = vmatmul.mubr.bf16.gmra.mrb[0].mxu0 %v1383
        %v2229 = vpop.f32.mrb[0].mxu0
        %v2230 = vadd.f32 0.0, %v2229
        %v2231 = vpop.f32.mrb[0].mxu0
        %v2232 = vpop.f32.mrb[0].mxu0
        %v2233 = vadd.f32 0.0, %v2232
        %v2234 = vpop.f32.mrb[0].mxu0
        %2235 = vmatprep.mubr.bf16.mxu0 0
        %2236 = vmatmul.mubr.bf16.gmra.mrb[0].mxu0 %v1386
        %v2237 = vpop.f32.mrb[0].mxu0
        %v2238 = vadd.f32 0.0, %v2237
        %v2239 = vpop.f32.mrb[0].mxu0
        %v2240 = vpop.f32.mrb[0].mxu0
        %v2241 = vadd.f32 0.0, %v2240
        %v2242 = vpop.f32.mrb[0].mxu0
        %2243 = vmatprep.mubr.bf16.mxu0 0
        %2244 = vmatmul.mubr.bf16.gmra.mrb[0].mxu0 %v1389
        %v2245 = vpop.f32.mrb[0].mxu0
        %v2246 = vadd.f32 0.0, %v2245
        %v2247 = vpop.f32.mrb[0].mxu0
        %v2248 = vpop.f32.mrb[0].mxu0
        %v2249 = vadd.f32 0.0, %v2248
        %v2250 = vpop.f32.mrb[0].mxu0
        %2251 = vmatprep.mubr.bf16.mxu0 0
        %2252 = vmatmul.mubr.bf16.gmra.mrb[0].mxu0 %v1392
        %v2253 = vpop.f32.mrb[0].mxu0
        %v2254 = vadd.f32 0.0, %v2253
        %v2255 = vpop.f32.mrb[0].mxu0
        %v2256 = vpop.f32.mrb[0].mxu0
        %v2257 = vadd.f32 0.0, %v2256
        %v2258 = vpop.f32.mrb[0].mxu0
        %2259 = vmatprep.mubr.bf16.mxu0 0
        %2260 = vmatmul.mubr.bf16.gmra.mrb[0].mxu0 %v1395
        %v2261 = vpop.f32.mrb[0].mxu0
        %v2262 = vadd.f32 0.0, %v2261
        %v2263 = vpop.f32.mrb[0].mxu0
        %v2264 = vpop.f32.mrb[0].mxu0
        %v2265 = vadd.f32 0.0, %v2264
        %v2266 = vpop.f32.mrb[0].mxu0
        %2267 = vmatprep.mubr.bf16.mxu0 0
        %2268 = vmatmul.mubr.bf16.gmra.mrb[0].mxu0 %v1398
        %v2269 = vpop.f32.mrb[0].mxu0
        %v2270 = vadd.f32 0.0, %v2269
        %v2271 = vpop.f32.mrb[0].mxu0
        %v2272 = vpop.f32.mrb[0].mxu0
        %v2273 = vadd.f32 0.0, %v2272
        %v2274 = vpop.f32.mrb[0].mxu0
        %2275 = vmatprep.mubr.bf16.mxu0 0
        %2276 = vmatmul.mubr.bf16.gmra.mrb[0].mxu0 %v1401
        %v2277 = vpop.f32.mrb[0].mxu0
        %v2278 = vadd.f32 0.0, %v2277
        %v2279 = vpop.f32.mrb[0].mxu0
        %v2280 = vpop.f32.mrb[0].mxu0
        %v2281 = vadd.f32 0.0, %v2280
        %v2282 = vpop.f32.mrb[0].mxu0
        %2283 = vmatprep.mubr.bf16.mxu0 0
        %2284 = vmatmul.mubr.bf16.gmra.mrb[0].mxu0 %v1404
        %v2285 = vpop.f32.mrb[0].mxu0
        %v2286 = vadd.f32 0.0, %v2285
        %v2287 = vpop.f32.mrb[0].mxu0
        %v2288 = vpop.f32.mrb[0].mxu0
        %v2289 = vadd.f32 0.0, %v2288
        %v2290 = vpop.f32.mrb[0].mxu0
        %2291 = vmatprep.mubr.bf16.mxu0 0
        %2292 = vmatmul.mubr.bf16.gmra.mrb[0].mxu0 %v1407
        %v2293 = vpop.f32.mrb[0].mxu0
        %v2294 = vadd.f32 0.0, %v2293
        %v2295 = vpop.f32.mrb[0].mxu0
        %v2296 = vpop.f32.mrb[0].mxu0
        %v2297 = vadd.f32 0.0, %v2296
        %v2298 = vpop.f32.mrb[0].mxu0
        %2299 = vmatprep.mubr.bf16.mxu0 0
        %2300 = vmatmul.mubr.bf16.gmra.mrb[0].mxu0 %v1410
        %v2301 = vpop.f32.mrb[0].mxu0
        %v2302 = vadd.f32 0.0, %v2301
        %v2303 = vpop.f32.mrb[0].mxu0
        %v2304 = vpop.f32.mrb[0].mxu0
        %v2305 = vadd.f32 0.0, %v2304
        %v2306 = vpop.f32.mrb[0].mxu0
        %2307 = vmatprep.mubr.bf16.mxu0 0
        %2308 = vmatmul.mubr.bf16.gmra.mrb[0].mxu0 %v1413
        %v2309 = vpop.f32.mrb[0].mxu0
        %v2310 = vadd.f32 0.0, %v2309
        %v2311 = vpop.f32.mrb[0].mxu0
        %v2312 = vpop.f32.mrb[0].mxu0
        %v2313 = vadd.f32 0.0, %v2312
        %v2314 = vpop.f32.mrb[0].mxu0
        %2315 = vmatprep.mubr.bf16.mxu0 0
        %2316 = vmatmul.mubr.bf16.gmra.mrb[0].mxu0 %v1416
        %v2317 = vpop.f32.mrb[0].mxu0
        %v2318 = vadd.f32 0.0, %v2317
        %v2319 = vpop.f32.mrb[0].mxu0
        %v2320 = vpop.f32.mrb[0].mxu0
        %v2321 = vadd.f32 0.0, %v2320
        %v2322 = vpop.f32.mrb[0].mxu0
        %2323 = vmatprep.mubr.bf16.mxu0 0
        %2324 = vmatmul.mubr.bf16.gmra.mrb[0].mxu0 %v1419
        %v2325 = vpop.f32.mrb[0].mxu0
        %v2326 = vadd.f32 0.0, %v2325
        %v2327 = vpop.f32.mrb[0].mxu0
        %v2328 = vpop.f32.mrb[0].mxu0
        %v2329 = vadd.f32 0.0, %v2328
        %v2330 = vpop.f32.mrb[0].mxu0
        %2331 = vmatprep.mubr.bf16.mxu0 0
        %2332 = vmatmul.mubr.bf16.gmra.mrb[0].mxu0 %v1422
        %v2333 = vpop.f32.mrb[0].mxu0
        %v2334 = vadd.f32 0.0, %v2333
        %v2335 = vpop.f32.mrb[0].mxu0
        %v2336 = vpop.f32.mrb[0].mxu0
        %v2337 = vadd.f32 0.0, %v2336
        %v2338 = vpop.f32.mrb[0].mxu0
        %2339 = vmatprep.mubr.bf16.mxu0 0
        %2340 = vmatmul.mubr.bf16.gmra.mrb[0].mxu0 %v1425
        %v2341 = vpop.f32.mrb[0].mxu0
        %v2342 = vadd.f32 0.0, %v2341
        %v2343 = vpop.f32.mrb[0].mxu0
        %v2344 = vpop.f32.mrb[0].mxu0
        %v2345 = vadd.f32 0.0, %v2344
        %v2346 = vpop.f32.mrb[0].mxu0
        %2347 = vmatprep.mubr.bf16.mxu0 0
        %2348 = vmatmul.mubr.bf16.gmra.mrb[0].mxu0 %v1428
        %v2349 = vpop.f32.mrb[0].mxu0
        %v2350 = vadd.f32 0.0, %v2349
        %v2351 = vpop.f32.mrb[0].mxu0
        %v2352 = vpop.f32.mrb[0].mxu0
        %v2353 = vadd.f32 0.0, %v2352
        %v2354 = vpop.f32.mrb[0].mxu0
        %2355 = vmatprep.mubr.bf16.mxu0 0
        %2356 = vmatmul.mubr.bf16.gmra.mrb[0].mxu0 %v1431
        %v2357 = vpop.f32.mrb[0].mxu0
        %v2358 = vadd.f32 0.0, %v2357
        %v2359 = vpop.f32.mrb[0].mxu0
        %v2360 = vpop.f32.mrb[0].mxu0
        %v2361 = vadd.f32 0.0, %v2360
        %v2362 = vpop.f32.mrb[0].mxu0
        %2363 = vmatprep.mubr.bf16.mxu0 0
        %2364 = vmatmul.mubr.bf16.gmra.mrb[0].mxu0 %v1434
        %v2365 = vpop.f32.mrb[0].mxu0
        %v2366 = vadd.f32 0.0, %v2365
        %v2367 = vpop.f32.mrb[0].mxu0
        %v2368 = vpop.f32.mrb[0].mxu0
        %v2369 = vadd.f32 0.0, %v2368
        %v2370 = vpop.f32.mrb[0].mxu0
        %2371 = vmatprep.mubr.bf16.mxu0 0
        %2372 = vmatmul.mubr.bf16.gmra.mrb[0].mxu0 %v1437
        %v2373 = vpop.f32.mrb[0].mxu0
        %v2374 = vadd.f32 0.0, %v2373
        %v2375 = vpop.f32.mrb[0].mxu0
        %v2376 = vpop.f32.mrb[0].mxu0
        %v2377 = vadd.f32 0.0, %v2376
        %v2378 = vpop.f32.mrb[0].mxu0
        %2379 = vmatprep.mubr.bf16.mxu0 0
        %2380 = vmatmul.mubr.bf16.gmra.mrb[0].mxu0 %v1440
        %v2381 = vpop.f32.mrb[0].mxu0
        %v2382 = vadd.f32 0.0, %v2381
        %v2383 = vpop.f32.mrb[0].mxu0
        %v2384 = vpop.f32.mrb[0].mxu0
        %v2385 = vadd.f32 0.0, %v2384
        %v2386 = vpop.f32.mrb[0].mxu0
        %2387 = vmatprep.mubr.bf16.mxu0 0
        %2388 = vmatmul.mubr.bf16.gmra.mrb[0].mxu0 %v1443
        %v2389 = vpop.f32.mrb[0].mxu0
        %v2390 = vadd.f32 0.0, %v2389
        %v2391 = vpop.f32.mrb[0].mxu0
        %v2392 = vpop.f32.mrb[0].mxu0
        %v2393 = vadd.f32 0.0, %v2392
        %v2394 = vpop.f32.mrb[0].mxu0
        %2395 = vmatprep.mubr.bf16.mxu0 0
        %2396 = vmatmul.mubr.bf16.gmra.mrb[0].mxu0 %v1446
        %v2397 = vpop.f32.mrb[0].mxu0
        %v2398 = vadd.f32 0.0, %v2397
        %v2399 = vpop.f32.mrb[0].mxu0
        %v2400 = vpop.f32.mrb[0].mxu0
        %v2401 = vadd.f32 0.0, %v2400
        %v2402 = vpop.f32.mrb[0].mxu0
        %2403 = vmatprep.mubr.bf16.mxu0 0
        %2404 = vmatmul.mubr.bf16.gmra.mrb[0].mxu0 %v1449
        %v2405 = vpop.f32.mrb[0].mxu0
        %v2406 = vadd.f32 0.0, %v2405
        %v2407 = vpop.f32.mrb[0].mxu0
        %v2408 = vpop.f32.mrb[0].mxu0
        %v2409 = vadd.f32 0.0, %v2408
        %v2410 = vpop.f32.mrb[0].mxu0
        %2411 = vmatprep.mubr.bf16.mxu0 0
        %2412 = vmatmul.mubr.bf16.gmra.mrb[0].mxu0 %v1452
        %v2413 = vpop.f32.mrb[0].mxu0
        %v2414 = vadd.f32 0.0, %v2413
        %v2415 = vpop.f32.mrb[0].mxu0
        %v2416 = vpop.f32.mrb[0].mxu0
        %v2417 = vadd.f32 0.0, %v2416
        %v2418 = vpop.f32.mrb[0].mxu0
        %2419 = vmatprep.mubr.bf16.mxu0 0
        %2420 = vmatmul.mubr.bf16.gmra.mrb[0].mxu0 %v1455
        %v2421 = vpop.f32.mrb[0].mxu0
        %v2422 = vadd.f32 0.0, %v2421
        %v2423 = vpop.f32.mrb[0].mxu0
        %v2424 = vpop.f32.mrb[0].mxu0
        %v2425 = vadd.f32 0.0, %v2424
        %v2426 = vpop.f32.mrb[0].mxu0
        %2427 = vmatprep.mubr.bf16.mxu0 0
        %2428 = vmatmul.mubr.bf16.gmra.mrb[0].mxu0 %v1458
        %v2429 = vpop.f32.mrb[0].mxu0
        %v2430 = vadd.f32 0.0, %v2429
        %v2431 = vpop.f32.mrb[0].mxu0
        %v2432 = vpop.f32.mrb[0].mxu0
        %v2433 = vadd.f32 0.0, %v2432
        %v2434 = vpop.f32.mrb[0].mxu0
        %2435 = vmatprep.mubr.bf16.mxu0 0
        %2436 = vmatmul.mubr.bf16.gmra.mrb[0].mxu0 %v1461
        %v2437 = vpop.f32.mrb[0].mxu0
        %v2438 = vadd.f32 0.0, %v2437
        %v2439 = vpop.f32.mrb[0].mxu0
        %v2440 = vpop.f32.mrb[0].mxu0
        %v2441 = vadd.f32 0.0, %v2440
        %v2442 = vpop.f32.mrb[0].mxu0
        %2443 = vmatprep.mubr.bf16.mxu0 0
        %2444 = vmatmul.mubr.bf16.gmra.mrb[0].mxu0 %v1464
        %v2445 = vpop.f32.mrb[0].mxu0
        %v2446 = vadd.f32 0.0, %v2445
        %v2447 = vpop.f32.mrb[0].mxu0
        %v2448 = vpop.f32.mrb[0].mxu0
        %v2449 = vadd.f32 0.0, %v2448
        %v2450 = vpop.f32.mrb[0].mxu0
        %2451 = vmatprep.mubr.bf16.mxu0 0
        %2452 = vmatmul.mubr.bf16.gmra.mrb[0].mxu0 %v1467
        %v2453 = vpop.f32.mrb[0].mxu0
        %v2454 = vadd.f32 0.0, %v2453
        %v2455 = vpop.f32.mrb[0].mxu0
        %v2456 = vpop.f32.mrb[0].mxu0
        %v2457 = vadd.f32 0.0, %v2456
        %v2458 = vpop.f32.mrb[0].mxu0
        %2459 = vmatprep.mubr.bf16.mxu0 0
        %2460 = vmatmul.mubr.bf16.gmra.mrb[0].mxu0 %v1470
        %v2461 = vpop.f32.mrb[0].mxu0
        %v2462 = vadd.f32 0.0, %v2461
        %v2463 = vpop.f32.mrb[0].mxu0
        %v2464 = vpop.f32.mrb[0].mxu0
        %v2465 = vadd.f32 0.0, %v2464
        %v2466 = vpop.f32.mrb[0].mxu0
        %2467 = vmatprep.mubr.bf16.mxu0 0
        %2468 = vmatmul.mubr.bf16.gmra.mrb[0].mxu0 %v1473
        %v2469 = vpop.f32.mrb[0].mxu0
        %v2470 = vadd.f32 0.0, %v2469
        %v2471 = vpop.f32.mrb[0].mxu0
        %v2472 = vpop.f32.mrb[0].mxu0
        %v2473 = vadd.f32 0.0, %v2472
        %v2474 = vpop.f32.mrb[0].mxu0
        %2475 = vmatprep.mubr.bf16.mxu0 0
        %2476 = vmatmul.mubr.bf16.gmra.mrb[0].mxu0 %v1476
        %v2477 = vpop.f32.mrb[0].mxu0
        %v2478 = vadd.f32 0.0, %v2477
        %v2479 = vpop.f32.mrb[0].mxu0
        %v2480 = vpop.f32.mrb[0].mxu0
        %v2481 = vadd.f32 0.0, %v2480
        %v2482 = vpop.f32.mrb[0].mxu0
        %2483 = vmatprep.mubr.bf16.mxu0 0
        %2484 = vmatmul.mubr.bf16.gmra.mrb[0].mxu0 %v1479
        %v2485 = vpop.f32.mrb[0].mxu0
        %v2486 = vadd.f32 0.0, %v2485
        %v2487 = vpop.f32.mrb[0].mxu0
        %v2488 = vpop.f32.mrb[0].mxu0
        %v2489 = vadd.f32 0.0, %v2488
        %v2490 = vpop.f32.mrb[0].mxu0
        %2491 = vmatprep.mubr.bf16.mxu0 0
        %2492 = vmatmul.mubr.bf16.gmra.mrb[0].mxu0 %v1482
        %v2493 = vpop.f32.mrb[0].mxu0
        %v2494 = vadd.f32 0.0, %v2493
        %v2495 = vpop.f32.mrb[0].mxu0
        %v2496 = vpop.f32.mrb[0].mxu0
        %v2497 = vadd.f32 0.0, %v2496
        %v2498 = vpop.f32.mrb[0].mxu0
        %2499 = vmatprep.mubr.bf16.mxu0 0
        %2500 = vmatmul.mubr.bf16.gmra.mrb[0].mxu0 %v1485
        %v2501 = vpop.f32.mrb[0].mxu0
        %v2502 = vadd.f32 0.0, %v2501
        %v2503 = vpop.f32.mrb[0].mxu0
        %v2504 = vpop.f32.mrb[0].mxu0
        %v2505 = vadd.f32 0.0, %v2504
        %v2506 = vpop.f32.mrb[0].mxu0
        %2507 = vmatprep.mubr.bf16.mxu0 0
        %2508 = vmatmul.mubr.bf16.gmra.mrb[0].mxu0 %v1488
        %v2509 = vpop.f32.mrb[0].mxu0
        %v2510 = vadd.f32 0.0, %v2509
        %v2511 = vpop.f32.mrb[0].mxu0
        %v2512 = vpop.f32.mrb[0].mxu0
        %v2513 = vadd.f32 0.0, %v2512
        %v2514 = vpop.f32.mrb[0].mxu0
        %2515 = vmatprep.mubr.bf16.mxu0 0
        %2516 = vmatmul.mubr.bf16.gmra.mrb[0].mxu0 %v1491
        %v2517 = vpop.f32.mrb[0].mxu0
        %v2518 = vadd.f32 0.0, %v2517
        %v2519 = vpop.f32.mrb[0].mxu0
        %v2520 = vpop.f32.mrb[0].mxu0
        %v2521 = vadd.f32 0.0, %v2520
        %v2522 = vpop.f32.mrb[0].mxu0
        %2523 = vmatprep.mubr.bf16.mxu0 0
        %2524 = vmatmul.mubr.bf16.gmra.mrb[0].mxu0 %v1494
        %v2525 = vpop.f32.mrb[0].mxu0
        %v2526 = vadd.f32 0.0, %v2525
        %v2527 = vpop.f32.mrb[0].mxu0
        %v2528 = vpop.f32.mrb[0].mxu0
        %v2529 = vadd.f32 0.0, %v2528
        %v2530 = vpop.f32.mrb[0].mxu0
        %2531 = vmatprep.mubr.bf16.mxu0 0
        %2532 = vmatmul.mubr.bf16.gmra.mrb[0].mxu0 %v1497
        %v2533 = vpop.f32.mrb[0].mxu0
        %v2534 = vadd.f32 0.0, %v2533
        %v2535 = vpop.f32.mrb[0].mxu0
        %v2536 = vpop.f32.mrb[0].mxu0
        %v2537 = vadd.f32 0.0, %v2536
        %v2538 = vpop.f32.mrb[0].mxu0
        %2539 = vmatprep.mubr.bf16.mxu0 0
        %2540 = vmatmul.mubr.bf16.gmra.mrb[0].mxu0 %v1500
        %v2541 = vpop.f32.mrb[0].mxu0
        %v2542 = vadd.f32 0.0, %v2541
        %v2543 = vpop.f32.mrb[0].mxu0
        %v2544 = vpop.f32.mrb[0].mxu0
        %v2545 = vadd.f32 0.0, %v2544
        %v2546 = vpop.f32.mrb[0].mxu0
        %2547 = vmatprep.mubr.bf16.mxu0 0
        %2548 = vmatmul.mubr.bf16.gmra.mrb[0].mxu0 %v1503
        %v2549 = vpop.f32.mrb[0].mxu0
        %v2550 = vadd.f32 0.0, %v2549
        %v2551 = vpop.f32.mrb[0].mxu0
        %v2552 = vpop.f32.mrb[0].mxu0
        %v2553 = vadd.f32 0.0, %v2552
        %v2554 = vpop.f32.mrb[0].mxu0
        %2555 = vmatprep.mubr.bf16.mxu0 0
        %2556 = vmatmul.mubr.bf16.gmra.mrb[0].mxu0 %v1506
        %v2557 = vpop.f32.mrb[0].mxu0
        %v2558 = vadd.f32 0.0, %v2557
        %v2559 = vpop.f32.mrb[0].mxu0
        %v2560 = vpop.f32.mrb[0].mxu0
        %v2561 = vadd.f32 0.0, %v2560
        %v2562 = vpop.f32.mrb[0].mxu0
        %2563 = vmatprep.mubr.bf16.mxu0 0
        %2564 = vmatmul.mubr.bf16.gmra.mrb[0].mxu0 %v1509
        %v2565 = vpop.f32.mrb[0].mxu0
        %v2566 = vadd.f32 0.0, %v2565
        %v2567 = vpop.f32.mrb[0].mxu0
        %v2568 = vpop.f32.mrb[0].mxu0
        %v2569 = vadd.f32 0.0, %v2568
        %v2570 = vpop.f32.mrb[0].mxu0
        %2571 = vdwg.mxu0
        %v2572 = vmax.f32 %v1550, 0.0
        %v2573 = vmax.f32 %v1553, 0.0
        %v2574 = vmax.f32 %v1558, 0.0
        %v2575 = vmax.f32 %v1561, 0.0
        %v2576 = vmax.f32 %v1566, 0.0
        %v2577 = vmax.f32 %v1569, 0.0
        %v2578 = vmax.f32 %v1574, 0.0
        %v2579 = vmax.f32 %v1577, 0.0
        %v2580 = vmax.f32 %v1582, 0.0
        %v2581 = vmax.f32 %v1585, 0.0
        %v2582 = vmax.f32 %v1590, 0.0
        %v2583 = vmax.f32 %v1593, 0.0
        %v2584 = vmax.f32 %v1598, 0.0
        %v2585 = vmax.f32 %v1601, 0.0
        %v2586 = vmax.f32 %v1606, 0.0
        %v2587 = vmax.f32 %v1609, 0.0
        %v2588 = vmax.f32 %v1614, 0.0
        %v2589 = vmax.f32 %v1617, 0.0
        %v2590 = vmax.f32 %v1622, 0.0
        %v2591 = vmax.f32 %v1625, 0.0
        %v2592 = vmax.f32 %v1630, 0.0
        %v2593 = vmax.f32 %v1633, 0.0
        %v2594 = vmax.f32 %v1638, 0.0
        %v2595 = vmax.f32 %v1641, 0.0
        %v2596 = vmax.f32 %v1646, 0.0
        %v2597 = vmax.f32 %v1649, 0.0
        %v2598 = vmax.f32 %v1654, 0.0
        %v2599 = vmax.f32 %v1657, 0.0
        %v2600 = vmax.f32 %v1662, 0.0
        %v2601 = vmax.f32 %v1665, 0.0
        %v2602 = vmax.f32 %v1670, 0.0
        %v2603 = vmax.f32 %v1673, 0.0
        %v2604 = vmax.f32 %v1678, 0.0
        %v2605 = vmax.f32 %v1681, 0.0
        %v2606 = vmax.f32 %v1686, 0.0
        %v2607 = vmax.f32 %v1689, 0.0
        %v2608 = vmax.f32 %v1694, 0.0
        %v2609 = vmax.f32 %v1697, 0.0
        %v2610 = vmax.f32 %v1702, 0.0
        %v2611 = vmax.f32 %v1705, 0.0
        %v2612 = vmax.f32 %v1710, 0.0
        %v2613 = vmax.f32 %v1713, 0.0
        %v2614 = vmax.f32 %v1718, 0.0
        %v2615 = vmax.f32 %v1721, 0.0
        %v2616 = vmax.f32 %v1726, 0.0
        %v2617 = vmax.f32 %v1729, 0.0
        %v2618 = vmax.f32 %v1734, 0.0
        %v2619 = vmax.f32 %v1737, 0.0
        %v2620 = vmax.f32 %v1742, 0.0
        %v2621 = vmax.f32 %v1745, 0.0
        %v2622 = vmax.f32 %v1750, 0.0
        %v2623 = vmax.f32 %v1753, 0.0
        %v2624 = vmax.f32 %v1758, 0.0
        %v2625 = vmax.f32 %v1761, 0.0
        %v2626 = vmax.f32 %v1766, 0.0
        %v2627 = vmax.f32 %v1769, 0.0
        %v2628 = vmax.f32 %v1774, 0.0
        %v2629 = vmax.f32 %v1777, 0.0
        %v2630 = vmax.f32 %v1782, 0.0
        %v2631 = vmax.f32 %v1785, 0.0
        %v2632 = vmax.f32 %v1790, 0.0
        %v2633 = vmax.f32 %v1793, 0.0
        %v2634 = vmax.f32 %v1798, 0.0
        %v2635 = vmax.f32 %v1801, 0.0
        %v2636 = vmax.f32 %v1806, 0.0
        %v2637 = vmax.f32 %v1809, 0.0
        %v2638 = vmax.f32 %v1814, 0.0
        %v2639 = vmax.f32 %v1817, 0.0
        %v2640 = vmax.f32 %v1822, 0.0
        %v2641 = vmax.f32 %v1825, 0.0
        %v2642 = vmax.f32 %v1830, 0.0
        %v2643 = vmax.f32 %v1833, 0.0
        %v2644 = vmax.f32 %v1838, 0.0
        %v2645 = vmax.f32 %v1841, 0.0
        %v2646 = vmax.f32 %v1846, 0.0
        %v2647 = vmax.f32 %v1849, 0.0
        %v2648 = vmax.f32 %v1854, 0.0
        %v2649 = vmax.f32 %v1857, 0.0
        %v2650 = vmax.f32 %v1862, 0.0
        %v2651 = vmax.f32 %v1865, 0.0
        %v2652 = vmax.f32 %v1870, 0.0
        %v2653 = vmax.f32 %v1873, 0.0
        %v2654 = vmax.f32 %v1878, 0.0
        %v2655 = vmax.f32 %v1881, 0.0
        %v2656 = vmax.f32 %v1886, 0.0
        %v2657 = vmax.f32 %v1889, 0.0
        %v2658 = vmax.f32 %v1894, 0.0
        %v2659 = vmax.f32 %v1897, 0.0
        %v2660 = vmax.f32 %v1902, 0.0
        %v2661 = vmax.f32 %v1905, 0.0
        %v2662 = vmax.f32 %v1910, 0.0
        %v2663 = vmax.f32 %v1913, 0.0
        %v2664 = vmax.f32 %v1918, 0.0
        %v2665 = vmax.f32 %v1921, 0.0
        %v2666 = vmax.f32 %v1926, 0.0
        %v2667 = vmax.f32 %v1929, 0.0
        %v2668 = vmax.f32 %v1934, 0.0
        %v2669 = vmax.f32 %v1937, 0.0
        %v2670 = vmax.f32 %v1942, 0.0
        %v2671 = vmax.f32 %v1945, 0.0
        %v2672 = vmax.f32 %v1950, 0.0
        %v2673 = vmax.f32 %v1953, 0.0
        %v2674 = vmax.f32 %v1958, 0.0
        %v2675 = vmax.f32 %v1961, 0.0
        %v2676 = vmax.f32 %v1966, 0.0
        %v2677 = vmax.f32 %v1969, 0.0
        %v2678 = vmax.f32 %v1974, 0.0
        %v2679 = vmax.f32 %v1977, 0.0
        %v2680 = vmax.f32 %v1982, 0.0
        %v2681 = vmax.f32 %v1985, 0.0
        %v2682 = vmax.f32 %v1990, 0.0
        %v2683 = vmax.f32 %v1993, 0.0
        %v2684 = vmax.f32 %v1998, 0.0
        %v2685 = vmax.f32 %v2001, 0.0
        %v2686 = vmax.f32 %v2006, 0.0
        %v2687 = vmax.f32 %v2009, 0.0
        %v2688 = vmax.f32 %v2014, 0.0
        %v2689 = vmax.f32 %v2017, 0.0
        %v2690 = vmax.f32 %v2022, 0.0
        %v2691 = vmax.f32 %v2025, 0.0
        %v2692 = vmax.f32 %v2030, 0.0
        %v2693 = vmax.f32 %v2033, 0.0
        %v2694 = vmax.f32 %v2038, 0.0
        %v2695 = vmax.f32 %v2041, 0.0
        %v2696 = vmax.f32 %v2046, 0.0
        %v2697 = vmax.f32 %v2049, 0.0
        %v2698 = vmax.f32 %v2054, 0.0
        %v2699 = vmax.f32 %v2057, 0.0
        %v2700 = vmax.f32 %v2062, 0.0
        %v2701 = vmax.f32 %v2065, 0.0
        %v2702 = vmax.f32 %v2070, 0.0
        %v2703 = vmax.f32 %v2073, 0.0
        %v2704 = vmax.f32 %v2078, 0.0
        %v2705 = vmax.f32 %v2081, 0.0
        %v2706 = vmax.f32 %v2086, 0.0
        %v2707 = vmax.f32 %v2089, 0.0
        %v2708 = vmax.f32 %v2094, 0.0
        %v2709 = vmax.f32 %v2097, 0.0
        %v2710 = vmax.f32 %v2102, 0.0
        %v2711 = vmax.f32 %v2105, 0.0
        %v2712 = vmax.f32 %v2110, 0.0
        %v2713 = vmax.f32 %v2113, 0.0
        %v2714 = vmax.f32 %v2118, 0.0
        %v2715 = vmax.f32 %v2121, 0.0
        %v2716 = vmax.f32 %v2126, 0.0
        %v2717 = vmax.f32 %v2129, 0.0
        %v2718 = vmax.f32 %v2134, 0.0
        %v2719 = vmax.f32 %v2137, 0.0
        %v2720 = vmax.f32 %v2142, 0.0
        %v2721 = vmax.f32 %v2145, 0.0
        %v2722 = vmax.f32 %v2150, 0.0
        %v2723 = vmax.f32 %v2153, 0.0
        %v2724 = vmax.f32 %v2158, 0.0
        %v2725 = vmax.f32 %v2161, 0.0
        %v2726 = vmax.f32 %v2166, 0.0
        %v2727 = vmax.f32 %v2169, 0.0
        %v2728 = vmax.f32 %v2174, 0.0
        %v2729 = vmax.f32 %v2177, 0.0
        %v2730 = vmax.f32 %v2182, 0.0
        %v2731 = vmax.f32 %v2185, 0.0
        %v2732 = vmax.f32 %v2190, 0.0
        %v2733 = vmax.f32 %v2193, 0.0
        %v2734 = vmax.f32 %v2198, 0.0
        %v2735 = vmax.f32 %v2201, 0.0
        %v2736 = vmax.f32 %v2206, 0.0
        %v2737 = vmax.f32 %v2209, 0.0
        %v2738 = vmax.f32 %v2214, 0.0
        %v2739 = vmax.f32 %v2217, 0.0
        %v2740 = vmax.f32 %v2222, 0.0
        %v2741 = vmax.f32 %v2225, 0.0
        %v2742 = vmax.f32 %v2230, 0.0
        %v2743 = vmax.f32 %v2233, 0.0
        %v2744 = vmax.f32 %v2238, 0.0
        %v2745 = vmax.f32 %v2241, 0.0
        %v2746 = vmax.f32 %v2246, 0.0
        %v2747 = vmax.f32 %v2249, 0.0
        %v2748 = vmax.f32 %v2254, 0.0
        %v2749 = vmax.f32 %v2257, 0.0
        %v2750 = vmax.f32 %v2262, 0.0
        %v2751 = vmax.f32 %v2265, 0.0
        %v2752 = vmax.f32 %v2270, 0.0
        %v2753 = vmax.f32 %v2273, 0.0
        %v2754 = vmax.f32 %v2278, 0.0
        %v2755 = vmax.f32 %v2281, 0.0
        %v2756 = vmax.f32 %v2286, 0.0
        %v2757 = vmax.f32 %v2289, 0.0
        %v2758 = vmax.f32 %v2294, 0.0
        %v2759 = vmax.f32 %v2297, 0.0
        %v2760 = vmax.f32 %v2302, 0.0
        %v2761 = vmax.f32 %v2305, 0.0
        %v2762 = vmax.f32 %v2310, 0.0
        %v2763 = vmax.f32 %v2313, 0.0
        %v2764 = vmax.f32 %v2318, 0.0
        %v2765 = vmax.f32 %v2321, 0.0
        %v2766 = vmax.f32 %v2326, 0.0
        %v2767 = vmax.f32 %v2329, 0.0
        %v2768 = vmax.f32 %v2334, 0.0
        %v2769 = vmax.f32 %v2337, 0.0
        %v2770 = vmax.f32 %v2342, 0.0
        %v2771 = vmax.f32 %v2345, 0.0
        %v2772 = vmax.f32 %v2350, 0.0
        %v2773 = vmax.f32 %v2353, 0.0
        %v2774 = vmax.f32 %v2358, 0.0
        %v2775 = vmax.f32 %v2361, 0.0
        %v2776 = vmax.f32 %v2366, 0.0
        %v2777 = vmax.f32 %v2369, 0.0
        %v2778 = vmax.f32 %v2374, 0.0
        %v2779 = vmax.f32 %v2377, 0.0
        %v2780 = vmax.f32 %v2382, 0.0
        %v2781 = vmax.f32 %v2385, 0.0
        %v2782 = vmax.f32 %v2390, 0.0
        %v2783 = vmax.f32 %v2393, 0.0
        %v2784 = vmax.f32 %v2398, 0.0
        %v2785 = vmax.f32 %v2401, 0.0
        %v2786 = vmax.f32 %v2406, 0.0
        %v2787 = vmax.f32 %v2409, 0.0
        %v2788 = vmax.f32 %v2414, 0.0
        %v2789 = vmax.f32 %v2417, 0.0
        %v2790 = vmax.f32 %v2422, 0.0
        %v2791 = vmax.f32 %v2425, 0.0
        %v2792 = vmax.f32 %v2430, 0.0
        %v2793 = vmax.f32 %v2433, 0.0
        %v2794 = vmax.f32 %v2438, 0.0
        %v2795 = vmax.f32 %v2441, 0.0
        %v2796 = vmax.f32 %v2446, 0.0
        %v2797 = vmax.f32 %v2449, 0.0
        %v2798 = vmax.f32 %v2454, 0.0
        %v2799 = vmax.f32 %v2457, 0.0
        %v2800 = vmax.f32 %v2462, 0.0
        %v2801 = vmax.f32 %v2465, 0.0
        %v2802 = vmax.f32 %v2470, 0.0
        %v2803 = vmax.f32 %v2473, 0.0
        %v2804 = vmax.f32 %v2478, 0.0
        %v2805 = vmax.f32 %v2481, 0.0
        %v2806 = vmax.f32 %v2486, 0.0
        %v2807 = vmax.f32 %v2489, 0.0
        %v2808 = vmax.f32 %v2494, 0.0
        %v2809 = vmax.f32 %v2497, 0.0
        %v2810 = vmax.f32 %v2502, 0.0
        %v2811 = vmax.f32 %v2505, 0.0
        %v2812 = vmax.f32 %v2510, 0.0
        %v2813 = vmax.f32 %v2513, 0.0
        %v2814 = vmax.f32 %v2518, 0.0
        %v2815 = vmax.f32 %v2521, 0.0
        %v2816 = vmax.f32 %v2526, 0.0
        %v2817 = vmax.f32 %v2529, 0.0
        %v2818 = vmax.f32 %v2534, 0.0
        %v2819 = vmax.f32 %v2537, 0.0
        %v2820 = vmax.f32 %v2542, 0.0
        %v2821 = vmax.f32 %v2545, 0.0
        %v2822 = vmax.f32 %v2550, 0.0
        %v2823 = vmax.f32 %v2553, 0.0
        %v2824 = vmax.f32 %v2558, 0.0
        %v2825 = vmax.f32 %v2561, 0.0
        %v2826 = vmax.f32 %v2566, 0.0
        %v2827 = vmax.f32 %v2569, 0.0
        %v2828 = vadd.f32 %v2572, %v2573
        %v2829 = vadd.f32 %v2828, %v2574
        %v2830 = vadd.f32 %v2829, %v2575
        %v2831 = vadd.f32 %v2830, %v2576
        %v2832 = vadd.f32 %v2831, %v2577
        %v2833 = vadd.f32 %v2832, %v2578
        %v2834 = vadd.f32 %v2833, %v2579
        %v2835 = vadd.f32 %v2834, %v2580
        %v2836 = vadd.f32 %v2835, %v2581
        %v2837 = vadd.f32 %v2836, %v2582
        %v2838 = vadd.f32 %v2837, %v2583
        %v2839 = vadd.f32 %v2838, %v2584
        %v2840 = vadd.f32 %v2839, %v2585
        %v2841 = vadd.f32 %v2840, %v2586
        %v2842 = vadd.f32 %v2841, %v2587
        %v2843 = vadd.f32 %v2842, %v2588
        %v2844 = vadd.f32 %v2843, %v2589
        %v2845 = vadd.f32 %v2844, %v2590
        %v2846 = vadd.f32 %v2845, %v2591
        %v2847 = vadd.f32 %v2846, %v2592
        %v2848 = vadd.f32 %v2847, %v2593
        %v2849 = vadd.f32 %v2848, %v2594
        %v2850 = vadd.f32 %v2849, %v2595
        %v2851 = vadd.f32 %v2850, %v2596
        %v2852 = vadd.f32 %v2851, %v2597
        %v2853 = vadd.f32 %v2852, %v2598
        %v2854 = vadd.f32 %v2853, %v2599
        %v2855 = vadd.f32 %v2854, %v2600
        %v2856 = vadd.f32 %v2855, %v2601
        %v2857 = vadd.f32 %v2856, %v2602
        %v2858 = vadd.f32 %v2857, %v2603
        %v2859 = vrot.slane %v2858, 4
        %v2860 = vadd.f32 %v2858, %v2859
        %v2861 = vrot.slane %v2860, 2
        %v2862 = vadd.f32 %v2860, %v2861
        %v2863 = vrot.slane %v2862, 1
        %v2864 = vadd.f32 %v2862, %v2863
        %v2865 = vadd.f32 %v2604, %v2605
        %v2866 = vadd.f32 %v2865, %v2606
        %v2867 = vadd.f32 %v2866, %v2607
        %v2868 = vadd.f32 %v2867, %v2608
        %v2869 = vadd.f32 %v2868, %v2609
        %v2870 = vadd.f32 %v2869, %v2610
        %v2871 = vadd.f32 %v2870, %v2611
        %v2872 = vadd.f32 %v2871, %v2612
        %v2873 = vadd.f32 %v2872, %v2613
        %v2874 = vadd.f32 %v2873, %v2614
        %v2875 = vadd.f32 %v2874, %v2615
        %v2876 = vadd.f32 %v2875, %v2616
        %v2877 = vadd.f32 %v2876, %v2617
        %v2878 = vadd.f32 %v2877, %v2618
        %v2879 = vadd.f32 %v2878, %v2619
        %v2880 = vadd.f32 %v2879, %v2620
        %v2881 = vadd.f32 %v2880, %v2621
        %v2882 = vadd.f32 %v2881, %v2622
        %v2883 = vadd.f32 %v2882, %v2623
        %v2884 = vadd.f32 %v2883, %v2624
        %v2885 = vadd.f32 %v2884, %v2625
        %v2886 = vadd.f32 %v2885, %v2626
        %v2887 = vadd.f32 %v2886, %v2627
        %v2888 = vadd.f32 %v2887, %v2628
        %v2889 = vadd.f32 %v2888, %v2629
        %v2890 = vadd.f32 %v2889, %v2630
        %v2891 = vadd.f32 %v2890, %v2631
        %v2892 = vadd.f32 %v2891, %v2632
        %v2893 = vadd.f32 %v2892, %v2633
        %v2894 = vadd.f32 %v2893, %v2634
        %v2895 = vadd.f32 %v2894, %v2635
        %v2896 = vrot.slane %v2895, 4
        %v2897 = vadd.f32 %v2895, %v2896
        %v2898 = vrot.slane %v2897, 2
        %v2899 = vadd.f32 %v2897, %v2898
        %v2900 = vrot.slane %v2899, 1
        %v2901 = vadd.f32 %v2899, %v2900
        %v2902 = vadd.f32 %v2636, %v2637
        %v2903 = vadd.f32 %v2902, %v2638
        %v2904 = vadd.f32 %v2903, %v2639
        %v2905 = vadd.f32 %v2904, %v2640
        %v2906 = vadd.f32 %v2905, %v2641
        %v2907 = vadd.f32 %v2906, %v2642
        %v2908 = vadd.f32 %v2907, %v2643
        %v2909 = vadd.f32 %v2908, %v2644
        %v2910 = vadd.f32 %v2909, %v2645
        %v2911 = vadd.f32 %v2910, %v2646
        %v2912 = vadd.f32 %v2911, %v2647
        %v2913 = vadd.f32 %v2912, %v2648
        %v2914 = vadd.f32 %v2913, %v2649
        %v2915 = vadd.f32 %v2914, %v2650
        %v2916 = vadd.f32 %v2915, %v2651
        %v2917 = vadd.f32 %v2916, %v2652
        %v2918 = vadd.f32 %v2917, %v2653
        %v2919 = vadd.f32 %v2918, %v2654
        %v2920 = vadd.f32 %v2919, %v2655
        %v2921 = vadd.f32 %v2920, %v2656
        %v2922 = vadd.f32 %v2921, %v2657
        %v2923 = vadd.f32 %v2922, %v2658
        %v2924 = vadd.f32 %v2923, %v2659
        %v2925 = vadd.f32 %v2924, %v2660
        %v2926 = vadd.f32 %v2925, %v2661
        %v2927 = vadd.f32 %v2926, %v2662
        %v2928 = vadd.f32 %v2927, %v2663
        %v2929 = vadd.f32 %v2928, %v2664
        %v2930 = vadd.f32 %v2929, %v2665
        %v2931 = vadd.f32 %v2930, %v2666
        %v2932 = vadd.f32 %v2931, %v2667
        %v2933 = vrot.slane %v2932, 4
        %v2934 = vadd.f32 %v2932, %v2933
        %v2935 = vrot.slane %v2934, 2
        %v2936 = vadd.f32 %v2934, %v2935
        %v2937 = vrot.slane %v2936, 1
        %v2938 = vadd.f32 %v2936, %v2937
        %v2939 = vadd.f32 %v2668, %v2669
        %v2940 = vadd.f32 %v2939, %v2670
        %v2941 = vadd.f32 %v2940, %v2671
        %v2942 = vadd.f32 %v2941, %v2672
        %v2943 = vadd.f32 %v2942, %v2673
        %v2944 = vadd.f32 %v2943, %v2674
        %v2945 = vadd.f32 %v2944, %v2675
        %v2946 = vadd.f32 %v2945, %v2676
        %v2947 = vadd.f32 %v2946, %v2677
        %v2948 = vadd.f32 %v2947, %v2678
        %v2949 = vadd.f32 %v2948, %v2679
        %v2950 = vadd.f32 %v2949, %v2680
        %v2951 = vadd.f32 %v2950, %v2681
        %v2952 = vadd.f32 %v2951, %v2682
        %v2953 = vadd.f32 %v2952, %v2683
        %v2954 = vadd.f32 %v2953, %v2684
        %v2955 = vadd.f32 %v2954, %v2685
        %v2956 = vadd.f32 %v2955, %v2686
        %v2957 = vadd.f32 %v2956, %v2687
        %v2958 = vadd.f32 %v2957, %v2688
        %v2959 = vadd.f32 %v2958, %v2689
        %v2960 = vadd.f32 %v2959, %v2690
        %v2961 = vadd.f32 %v2960, %v2691
        %v2962 = vadd.f32 %v2961, %v2692
        %v2963 = vadd.f32 %v2962, %v2693
        %v2964 = vadd.f32 %v2963, %v2694
        %v2965 = vadd.f32 %v2964, %v2695
        %v2966 = vadd.f32 %v2965, %v2696
        %v2967 = vadd.f32 %v2966, %v2697
        %v2968 = vadd.f32 %v2967, %v2698
        %v2969 = vadd.f32 %v2968, %v2699
        %v2970 = vrot.slane %v2969, 4
        %v2971 = vadd.f32 %v2969, %v2970
        %v2972 = vrot.slane %v2971, 2
        %v2973 = vadd.f32 %v2971, %v2972
        %v2974 = vrot.slane %v2973, 1
        %v2975 = vadd.f32 %v2973, %v2974
        %v2976 = vadd.f32 %v2700, %v2701
        %v2977 = vadd.f32 %v2976, %v2702
        %v2978 = vadd.f32 %v2977, %v2703
        %v2979 = vadd.f32 %v2978, %v2704
        %v2980 = vadd.f32 %v2979, %v2705
        %v2981 = vadd.f32 %v2980, %v2706
        %v2982 = vadd.f32 %v2981, %v2707
        %v2983 = vadd.f32 %v2982, %v2708
        %v2984 = vadd.f32 %v2983, %v2709
        %v2985 = vadd.f32 %v2984, %v2710
        %v2986 = vadd.f32 %v2985, %v2711
        %v2987 = vadd.f32 %v2986, %v2712
        %v2988 = vadd.f32 %v2987, %v2713
        %v2989 = vadd.f32 %v2988, %v2714
        %v2990 = vadd.f32 %v2989, %v2715
        %v2991 = vadd.f32 %v2990, %v2716
        %v2992 = vadd.f32 %v2991, %v2717
        %v2993 = vadd.f32 %v2992, %v2718
        %v2994 = vadd.f32 %v2993, %v2719
        %v2995 = vadd.f32 %v2994, %v2720
        %v2996 = vadd.f32 %v2995, %v2721
        %v2997 = vadd.f32 %v2996, %v2722
        %v2998 = vadd.f32 %v2997, %v2723
        %v2999 = vadd.f32 %v2998, %v2724
        %v3000 = vadd.f32 %v2999, %v2725
        %v3001 = vadd.f32 %v3000, %v2726
        %v3002 = vadd.f32 %v3001, %v2727
        %v3003 = vadd.f32 %v3002, %v2728
        %v3004 = vadd.f32 %v3003, %v2729
        %v3005 = vadd.f32 %v3004, %v2730
        %v3006 = vadd.f32 %v3005, %v2731
        %v3007 = vrot.slane %v3006, 4
        %v3008 = vadd.f32 %v3006, %v3007
        %v3009 = vrot.slane %v3008, 2
        %v3010 = vadd.f32 %v3008, %v3009
        %v3011 = vrot.slane %v3010, 1
        %v3012 = vadd.f32 %v3010, %v3011
        %v3013 = vadd.f32 %v2732, %v2733
        %v3014 = vadd.f32 %v3013, %v2734
        %v3015 = vadd.f32 %v3014, %v2735
        %v3016 = vadd.f32 %v3015, %v2736
        %v3017 = vadd.f32 %v3016, %v2737
        %v3018 = vadd.f32 %v3017, %v2738
        %v3019 = vadd.f32 %v3018, %v2739
        %v3020 = vadd.f32 %v3019, %v2740
        %v3021 = vadd.f32 %v3020, %v2741
        %v3022 = vadd.f32 %v3021, %v2742
        %v3023 = vadd.f32 %v3022, %v2743
        %v3024 = vadd.f32 %v3023, %v2744
        %v3025 = vadd.f32 %v3024, %v2745
        %v3026 = vadd.f32 %v3025, %v2746
        %v3027 = vadd.f32 %v3026, %v2747
        %v3028 = vadd.f32 %v3027, %v2748
        %v3029 = vadd.f32 %v3028, %v2749
        %v3030 = vadd.f32 %v3029, %v2750
        %v3031 = vadd.f32 %v3030, %v2751
        %v3032 = vadd.f32 %v3031, %v2752
        %v3033 = vadd.f32 %v3032, %v2753
        %v3034 = vadd.f32 %v3033, %v2754
        %v3035 = vadd.f32 %v3034, %v2755
        %v3036 = vadd.f32 %v3035, %v2756
        %v3037 = vadd.f32 %v3036, %v2757
        %v3038 = vadd.f32 %v3037, %v2758
        %v3039 = vadd.f32 %v3038, %v2759
        %v3040 = vadd.f32 %v3039, %v2760
        %v3041 = vadd.f32 %v3040, %v2761
        %v3042 = vadd.f32 %v3041, %v2762
        %v3043 = vadd.f32 %v3042, %v2763
        %v3044 = vrot.slane %v3043, 4
        %v3045 = vadd.f32 %v3043, %v3044
        %v3046 = vrot.slane %v3045, 2
        %v3047 = vadd.f32 %v3045, %v3046
        %v3048 = vrot.slane %v3047, 1
        %v3049 = vadd.f32 %v3047, %v3048
        %v3050 = vadd.f32 %v2764, %v2765
        %v3051 = vadd.f32 %v3050, %v2766
        %v3052 = vadd.f32 %v3051, %v2767
        %v3053 = vadd.f32 %v3052, %v2768
        %v3054 = vadd.f32 %v3053, %v2769
        %v3055 = vadd.f32 %v3054, %v2770
        %v3056 = vadd.f32 %v3055, %v2771
        %v3057 = vadd.f32 %v3056, %v2772
        %v3058 = vadd.f32 %v3057, %v2773
        %v3059 = vadd.f32 %v3058, %v2774
        %v3060 = vadd.f32 %v3059, %v2775
        %v3061 = vadd.f32 %v3060, %v2776
        %v3062 = vadd.f32 %v3061, %v2777
        %v3063 = vadd.f32 %v3062, %v2778
        %v3064 = vadd.f32 %v3063, %v2779
        %v3065 = vadd.f32 %v3064, %v2780
        %v3066 = vadd.f32 %v3065, %v2781
        %v3067 = vadd.f32 %v3066, %v2782
        %v3068 = vadd.f32 %v3067, %v2783
        %v3069 = vadd.f32 %v3068, %v2784
        %v3070 = vadd.f32 %v3069, %v2785
        %v3071 = vadd.f32 %v3070, %v2786
        %v3072 = vadd.f32 %v3071, %v2787
        %v3073 = vadd.f32 %v3072, %v2788
        %v3074 = vadd.f32 %v3073, %v2789
        %v3075 = vadd.f32 %v3074, %v2790
        %v3076 = vadd.f32 %v3075, %v2791
        %v3077 = vadd.f32 %v3076, %v2792
        %v3078 = vadd.f32 %v3077, %v2793
        %v3079 = vadd.f32 %v3078, %v2794
        %v3080 = vadd.f32 %v3079, %v2795
        %v3081 = vrot.slane %v3080, 4
        %v3082 = vadd.f32 %v3080, %v3081
        %v3083 = vrot.slane %v3082, 2
        %v3084 = vadd.f32 %v3082, %v3083
        %v3085 = vrot.slane %v3084, 1
        %v3086 = vadd.f32 %v3084, %v3085
        %v3087 = vadd.f32 %v2796, %v2797
        %v3088 = vadd.f32 %v3087, %v2798
        %v3089 = vadd.f32 %v3088, %v2799
        %v3090 = vadd.f32 %v3089, %v2800
        %v3091 = vadd.f32 %v3090, %v2801
        %v3092 = vadd.f32 %v3091, %v2802
        %v3093 = vadd.f32 %v3092, %v2803
        %v3094 = vadd.f32 %v3093, %v2804
        %v3095 = vadd.f32 %v3094, %v2805
        %v3096 = vadd.f32 %v3095, %v2806
        %v3097 = vadd.f32 %v3096, %v2807
        %v3098 = vadd.f32 %v3097, %v2808
        %v3099 = vadd.f32 %v3098, %v2809
        %v3100 = vadd.f32 %v3099, %v2810
        %v3101 = vadd.f32 %v3100, %v2811
        %v3102 = vadd.f32 %v3101, %v2812
        %v3103 = vadd.f32 %v3102, %v2813
        %v3104 = vadd.f32 %v3103, %v2814
        %v3105 = vadd.f32 %v3104, %v2815
        %v3106 = vadd.f32 %v3105, %v2816
        %v3107 = vadd.f32 %v3106, %v2817
        %v3108 = vadd.f32 %v3107, %v2818
        %v3109 = vadd.f32 %v3108, %v2819
        %v3110 = vadd.f32 %v3109, %v2820
        %v3111 = vadd.f32 %v3110, %v2821
        %v3112 = vadd.f32 %v3111, %v2822
        %v3113 = vadd.f32 %v3112, %v2823
        %v3114 = vadd.f32 %v3113, %v2824
        %v3115 = vadd.f32 %v3114, %v2825
        %v3116 = vadd.f32 %v3115, %v2826
        %v3117 = vadd.f32 %v3116, %v2827
        %v3118 = vrot.slane %v3117, 4
        %v3119 = vadd.f32 %v3117, %v3118
        %v3120 = vrot.slane %v3119, 2
        %v3121 = vadd.f32 %v3119, %v3120
        %v3122 = vrot.slane %v3121, 1
        %v3123 = vadd.f32 %v3121, %v3122
        %v3124 = vmul.f32 %v2864, 0.00390625
        %v3125 = vmul.f32 %v2901, 0.00390625
        %v3126 = vmul.f32 %v2938, 0.00390625
        %v3127 = vmul.f32 %v2975, 0.00390625
        %v3128 = vmul.f32 %v3012, 0.00390625
        %v3129 = vmul.f32 %v3049, 0.00390625
        %v3130 = vmul.f32 %v3086, 0.00390625
        %v3131 = vmul.f32 %v3123, 0.00390625
        %vm3140 = vcmask 1041409
        %v3141 = vsel %vm3140, %v3125, %v3124
        %vm3142 = vcmask 1042434
        %v3143 = vsel %vm3142, %v3126, %v3141
        %vm3144 = vcmask 1043459
        %v3145 = vsel %vm3144, %v3127, %v3143
        %vm3146 = vcmask 1044484
        %v3147 = vsel %vm3146, %v3128, %v3145
        %vm3148 = vcmask 1045509
        %v3149 = vsel %vm3148, %v3129, %v3147
        %vm3150 = vcmask 1046534
        %v3151 = vsel %vm3150, %v3130, %v3149
        %vm3152 = vcmask 1047559
        %v3153 = vsel %vm3152, %v3131, %v3151
        %3155 = vst [vmem:[%s202] sm:$0xff] %v3153
        %v3156 = vpack.c.bf16 %v3124, %v3124
        %v3157 = vpack.c.bf16 %v3125, %v3125
        %v3158 = vpack.c.bf16 %v3126, %v3126
        %v3159 = vpack.c.bf16 %v3127, %v3127
        %v3160 = vpack.c.bf16 %v3128, %v3128
        %v3161 = vpack.c.bf16 %v3129, %v3129
        %v3162 = vpack.c.bf16 %v3130, %v3130
        %v3163 = vpack.c.bf16 %v3131, %v3131
        %v3164 = vld [vmem:[%s2] sm:$0xf]
        %v3165 = vld [vmem:[%s2 + $0x4] sm:$0xf]
        %v3166 = vld [vmem:[%s2 + $0x8] sm:$0xf]
        %v3167 = vld [vmem:[%s2 + $0xc] sm:$0xf]
        %v3168 = vld [vmem:[%s2 + $0x10] sm:$0xf]
        %v3169 = vld [vmem:[%s2 + $0x14] sm:$0xf]
        %v3170 = vld [vmem:[%s2 + $0x18] sm:$0xf]
        %v3171 = vld [vmem:[%s2 + $0x1c] sm:$0xf]
        %v3172 = vld [vmem:[%s2 + $0x20] sm:$0xf]
        %v3173 = vld [vmem:[%s2 + $0x24] sm:$0xf]
        %v3174 = vld [vmem:[%s2 + $0x28] sm:$0xf]
        %v3175 = vld [vmem:[%s2 + $0x2c] sm:$0xf]
        %v3176 = vld [vmem:[%s2 + $0x30] sm:$0xf]
        %v3177 = vld [vmem:[%s2 + $0x34] sm:$0xf]
        %v3178 = vld [vmem:[%s2 + $0x38] sm:$0xf]
        %v3179 = vld [vmem:[%s2 + $0x3c] sm:$0xf]
        %v3188 = vunpack.c.l.b16 %v3156
        %v3189 = vunpack.c.l.b16 %v3157
        %v3190 = vunpack.c.l.b16 %v3158
        %v3191 = vunpack.c.l.b16 %v3159
        %v3192 = vunpack.c.l.b16 %v3160
        %v3193 = vunpack.c.l.b16 %v3161
        %v3194 = vunpack.c.l.b16 %v3162
        %v3195 = vunpack.c.l.b16 %v3163
        %v3196 = vsel %vm3140, %v3189, %v3188
        %v3197 = vsel %vm3142, %v3190, %v3196
        %v3198 = vsel %vm3144, %v3191, %v3197
        %v3199 = vsel %vm3146, %v3192, %v3198
        %v3200 = vsel %vm3148, %v3193, %v3199
        %v3201 = vsel %vm3150, %v3194, %v3200
        %v3202 = vsel %vm3152, %v3195, %v3201
        %v3203 = vpack.c.b16 %v3202, %v3202
        %v3221 = vunpack.c.l.b16 %v3164
        %v3222 = vunpack.c.l.b16 %v3165
        %v3223 = vunpack.c.l.b16 %v3166
        %v3224 = vunpack.c.l.b16 %v3167
        %v3225 = vunpack.c.l.b16 %v3168
        %v3226 = vunpack.c.l.b16 %v3169
        %v3227 = vunpack.c.l.b16 %v3170
        %v3228 = vunpack.c.l.b16 %v3171
        %v3229 = vunpack.c.l.b16 %v3172
        %v3230 = vunpack.c.l.b16 %v3173
        %v3231 = vunpack.c.l.b16 %v3174
        %v3232 = vunpack.c.l.b16 %v3175
        %v3233 = vunpack.c.l.b16 %v3176
        %v3234 = vunpack.c.l.b16 %v3177
        %v3235 = vunpack.c.l.b16 %v3178
        %v3236 = vunpack.c.l.b16 %v3179
        %v3237 = vpack.c.b16 %v3222, %v3221
        %v3238 = vpack.c.b16 %v3224, %v3223
        %v3239 = vpack.c.b16 %v3226, %v3225
        %v3240 = vpack.c.b16 %v3228, %v3227
        %v3241 = vpack.c.b16 %v3230, %v3229
        %v3242 = vpack.c.b16 %v3232, %v3231
        %v3243 = vpack.c.b16 %v3234, %v3233
        %v3244 = vpack.c.b16 %v3236, %v3235
        %3253 = vmatprep.subr.bf16.mxu0 0
        %3254 = vmatpush1.bf16.msra.mxu0 %v3237
        %3255 = vmatprep.subr.bf16.mxu0 0
        %3256 = vmatpush1.bf16.msra.mxu0 %v3238
        %3257 = vmatprep.subr.bf16.mxu0 0
        %3258 = vmatpush1.bf16.msra.mxu0 %v3239
        %3259 = vmatprep.subr.bf16.mxu0 0
        %3260 = vmatpush1.bf16.msra.mxu0 %v3240
        %3261 = vmatprep.subr.bf16.mxu0 0
        %3262 = vmatpush1.bf16.msra.mxu0 %v3241
        %3263 = vmatprep.subr.bf16.mxu0 0
        %3264 = vmatpush1.bf16.msra.mxu0 %v3242
        %3265 = vmatprep.subr.bf16.mxu0 0
        %3266 = vmatpush1.bf16.msra.mxu0 %v3243
        %3267 = vmatprep.subr.bf16.mxu0 0
        %3268 = vmatpush1.bf16.msra.mxu0 %v3244
        %3269 = vmatprep.subr.bf16.mxu0 0
        %3270 = vmatpush1.bf16.msra.mxu0 0
        %3271 = vmatprep.subr.bf16.mxu0 0
        %3272 = vmatpush1.bf16.msra.mxu0 0
        %3273 = vmatprep.subr.bf16.mxu0 0
        %3274 = vmatpush1.bf16.msra.mxu0 0
        %3275 = vmatprep.subr.bf16.mxu0 0
        %3276 = vmatpush1.bf16.msra.mxu0 0
        %3277 = vmatprep.subr.bf16.mxu0 0
        %3278 = vmatpush1.bf16.msra.mxu0 0
        %3279 = vmatprep.subr.bf16.mxu0 0
        %3280 = vmatpush1.bf16.msra.mxu0 0
        %3281 = vmatprep.subr.bf16.mxu0 0
        %3282 = vmatpush1.bf16.msra.mxu0 0
        %3283 = vmatprep.subr.bf16.mxu0 0
        %3284 = vmatpush1.bf16.msra.mxu0 0
        %3285 = vmatprep.mubr.bf16.mxu0 0
        %3286 = vmatmul.mubr.bf16.gmra.mrb[0].mxu0 %v3203
        %v3287 = vpop.f32.mrb[0].mxu0
        %v3288 = vadd.f32 0.0, %v3287
        %v3289 = vpop.f32.mrb[0].mxu0
        %v3290 = vpop.f32.mrb[0].mxu0
        %v3291 = vpop.f32.mrb[0].mxu0
        %3292 = vdwg.mxu0
        %3293 = vst [vmem:[%s195] sm:$0xff] %v3288
        %s3294 = sand.u32 %s98, 1
        %s3295 = scalar_lea.sflag [#allocation3], %s3294
        %s3296 = sand.u32 %s98, 1
        %s3297 = smul.addr %s3296, 8
        %s3298 = scalar_lea.vmem [#allocation2], %s3297
        %s3299 = sand.u32 %s124, 1
        %s3300 = scalar_lea.sflag [#allocation5], %s3299
        %s3301 = sand.u32 %s124, 1
        %s3302 = smul.addr %s3301, 8
        %s3303 = scalar_lea.vmem [#allocation4], %s3302
        // Predicated region
        $region33: #{tpu_custom_call.1} parent=31 // pred_check
          %p3304 = pneg %p108
        $region34: #{tpu_custom_call.1} parent=31 // pred_check_branch
          %3306 = sbr.rel (%p3304) target = $region36
        $region35: #{tpu_custom_call.1} parent=31 // pred_region
          %s3308 = ssub.s32 128, 128
          %3309 = vsyncadd %s3295, %s3308
          %s3310 = smul.addr %s22, 128
          %s3311 = scalar_lea.hbm %s3, %s3310
          %s3313 = sshll.u32 %s3298, 4
          %s3314 = int_to_ptr.vmem [resolvable:$true] %s3313
          %3316 = dma.vmem_to_hbm [thread:$0]  %s3314, 128, %s3311, %s3295
        $region36: #{tpu_custom_call.1} parent=31 // pred_fallthru
          _
        // Predicated region
        $region37: #{tpu_custom_call.1} parent=31 // pred_check
          %p3317 = pneg %p134
        $region38: #{tpu_custom_call.1} parent=31 // pred_check_branch
          %3319 = sbr.rel (%p3317) target = $region40
        $region39: #{tpu_custom_call.1} parent=31 // pred_region
          %s3321 = ssub.s32 128, 128
          %3322 = vsyncadd %s3300, %s3321
          %s3323 = smul.addr %s22, 128
          %s3324 = scalar_lea.hbm %s4, %s3323
          %s3326 = sshll.u32 %s3303, 4
          %s3327 = int_to_ptr.vmem [resolvable:$true] %s3326
          %3329 = dma.vmem_to_hbm [thread:$0]  %s3327, 128, %s3324, %s3300
        $region40: #{tpu_custom_call.1} parent=31 // pred_fallthru
          _
      $region32: #{tpu_custom_call.1} parent=5 // pred_fallthru
        _
      %p3330 = scmp.le.s32.totalorder 2, %s17
      // Predicated region
      $region41: #{tpu_custom_call.1} parent=5 // pred_check
        %p3331 = pneg %p3330
      $region42: #{tpu_custom_call.1} parent=5 // pred_check_branch
        %3333 = sbr.rel (%p3331) target = $region44
      $region43: #{tpu_custom_call.1} parent=5 // pred_region
        %s3334 = ssub.s32 %s17, 2
        // Predicated region
        $region45: #{tpu_custom_call.1} parent=43 // pred_check
          %p3335 = pneg %p114
        $region46: #{tpu_custom_call.1} parent=43 // pred_check_branch
          %3337 = sbr.rel (%p3335) target = $region48
        $region47: #{tpu_custom_call.1} parent=43 // pred_region
          %s3338 = sand.u32 %s99, 1
          %s3339 = scalar_lea.sflag [#allocation3], %s3338
          %s3340 = sand.u32 %s99, 1
          %s3341 = smul.addr %s3340, 8
          %s3342 = scalar_lea.vmem [#allocation2], %s3341
          %3343 = dma.done %s3339, 128
        $region48: #{tpu_custom_call.1} parent=43 // pred_fallthru
          _
        // Predicated region
        $region49: #{tpu_custom_call.1} parent=43 // pred_check
          %p3344 = pneg %p140
        $region50: #{tpu_custom_call.1} parent=43 // pred_check_branch
          %3346 = sbr.rel (%p3344) target = $region52
        $region51: #{tpu_custom_call.1} parent=43 // pred_region
          %s3347 = sand.u32 %s125, 1
          %s3348 = scalar_lea.sflag [#allocation5], %s3347
          %s3349 = sand.u32 %s125, 1
          %s3350 = smul.addr %s3349, 8
          %s3351 = scalar_lea.vmem [#allocation4], %s3350
          %3352 = dma.done %s3348, 128
        $region52: #{tpu_custom_call.1} parent=43 // pred_fallthru
          _
      $region44: #{tpu_custom_call.1} parent=5 // pred_fallthru
        _
    $region6: #{tpu_custom_call.1} parent=1 // loop_footer
      %s21 = sadd.s32 1, %s17
    $region7: #{tpu_custom_call.1} parent=1 // loop_footer_branch
      %16 = sbr.rel target = $region3
    $region8: #{tpu_custom_call.1} parent=1 // loop_exit
      _
    %3353 = vsyncpa [#allocation3], 1
    %s3354 = scalar_lea.sflag [#allocation3], 1
    %3355 = vsyncpa %s3354, 1
    %3356 = vsyncpa [#allocation5], 1
    %s3357 = scalar_lea.sflag [#allocation5], 1
    %3358 = vsyncpa %s3357, 1

</llo_original>
